<compile_context>
chip_gen: v5e
topology: v5e:2x2
jax: 0.10.0
libtpu: 0.0.40
codegen_flags: <defaults>
</compile_context>

<pallas_src>
import jax
import jax.numpy as jnp
from jax.experimental import pallas as pl
from jax.experimental.pallas import tpu as pltpu


def _round_up(n, m):
    return ((n + m - 1) // m) * m


def _mlp_kernel(x_ref, w1_ref, b1_ref, w2_ref, b2_ref, o_ref):
    # x:(TB,D) f32|bf16 | w1:(D,Hp) bf16 | b1:(1,Hp) f32 | w2:(Hp,128) bf16 | b2:(1,1) f32 | o:(TB,1) f32
    x = x_ref[...].astype(jnp.bfloat16)                  # no-op if the producer already hands us bf16
    h = jnp.dot(x, w1_ref[...],
                preferred_element_type=jnp.float32)      # (TB, Hp)   MXU, f32 accumulate
    h = jnp.maximum(h + b1_ref[...], 0.0)                # bias + ReLU, VPU
    # Linear2 (out_features == 1): keep it on the (otherwise idle) MXU instead of a
    # full (TB, Hp) XLU transpose.  w2 is lane-padded to 128 cols (col 0 = w2, rest 0).
    zw = jnp.dot(h.astype(jnp.bfloat16), w2_ref[...],
                 preferred_element_type=jnp.float32)     # (TB, 128)
    z = zw[:, 0:1] + b2_ref[...]                         # (TB, 1)
    o_ref[...] = jax.nn.sigmoid(z).astype(o_ref.dtype)   # EUP sigmoid + store
    # Ragged last grid step: the tail rows of the x block hold unspecified data, but
    # rows are independent and Pallas drops the out-of-bounds part of the (TB,1)
    # writeback, so no tail masking is needed (and none of it leaks into valid rows).


def neural_net2_forward(x, w1, b1, w2, b2, *, block_b=1024, min_kernel_batch=256):
    """Fused forward: sigmoid(relu(x @ w1 + b1) @ w2[:, None] + b2).

    x : (B, D) float32 or bfloat16 (bf16 is used directly, no extra cast pass)
    w1: (D, H) float32   -- linear1 weight stored pre-transposed (in, out)
    b1: (H,)   float32
    w2: (H,)   float32   -- linear2 weight (out_features == 1)
    b2: ()     float32
    returns (B, 1) float32
    """
    B, D = x.shape
    H = w1.shape[1]

    # Tiny batches: launch + DMA setup dominates -- plain XLA (f32) is faster.
    if B < min_kernel_batch:
        h = jnp.maximum(x.astype(jnp.float32) @ w1 + b1[None, :], 0.0)
        return jax.nn.sigmoid(h @ w2[:, None] + b2)

    # ---- parameter prep (tiny, outside the hot kernel) ----
    Hp = _round_up(H, 128)                                                # lane-dense hidden width
    w1_p = jnp.pad(w1, ((0, 0), (0, Hp - H))).astype(jnp.bfloat16)        # (D, Hp)
    b1_p = jnp.pad(b1.astype(jnp.float32), (0, Hp - H)).reshape(1, Hp)    # (1, Hp)
    w2_p = jnp.pad(w2.astype(jnp.float32).reshape(H, 1),
                   ((0, Hp - H), (0, 127))).astype(jnp.bfloat16)          # (Hp, 128), col 0 = w2
    b2_p = jnp.asarray(b2, jnp.float32).reshape(1, 1)                     # (1, 1)

    # ---- batch tile sizing ----
    x_itemsize = x.dtype.itemsize
    tb = min(_round_up(block_b, 8), _round_up(B, 8))

    def vmem_bytes(t):
        xb = 2 * t * D * x_itemsize                        # double-buffered x tile
        xc = t * D * 2 if x_itemsize > 2 else 0            # in-kernel bf16 cast temp
        wb = 2 * (D * Hp * 2 + Hp * 128 * 2 + Hp * 4 + 4)  # resident weights (Pallas double-buffers)
        hb = t * Hp * (4 + 2)                              # h (f32) + bf16 cast
        zb = t * 128 * 4                                   # matmul-2 result
        ob = 2 * t * 4                                     # double-buffered output tile
        return xb + xc + wb + hb + zb + ob

    VMEM_TARGET = 40 << 20            # headroom under v7x's 64 MiB physical VMEM
    while tb > 256 and vmem_bytes(tb) > VMEM_TARGET:
        tb = _round_up(tb // 2, 8)

    # Prefer >= 8 grid steps (so v7x's two cores still see a pipeline after a megacore
    # split) without dropping below ~512-row tiles, where the ~0.35us/step fixed
    # overhead starts to dominate.
    while pl.cdiv(B, tb) < 8 and tb >= 1024:
        tb = _round_up(tb // 2, 8)

    steps = pl.cdiv(B, tb)
    dim_semantics = ("parallel",) if steps >= 16 else ("arbitrary",)

    est = vmem_bytes(tb)
    vmem_limit = int(est * 1.25) if int(est * 1.25) > (32 << 20) else None

    cost = pl.CostEstimate(
        flops=2 * B * D * Hp + 2 * B * Hp * 128,
        transcendentals=B,
        bytes_accessed=B * D * x_itemsize + D * Hp * 2 + Hp * 128 * 2 + Hp * 4 + 4 + B * 4,
    )

    out = pl.pallas_call(
        _mlp_kernel,
        out_shape=jax.ShapeDtypeStruct((B, 1), jnp.float32),
        grid=(steps,),
        in_specs=[
            pl.BlockSpec((tb, D), lambda i: (i, 0)),    # x: streamed / pipelined over batch
            # Weights stay VMEM-resident across grid steps (index_map -> (0, 0)).
            # At large D, pipeline_mode=pl.Buffered(1) on these would halve their
            # resident VMEM; irrelevant at small D so left at the default.
            pl.BlockSpec((D, Hp), lambda i: (0, 0)),    # W1
            pl.BlockSpec((1, Hp), lambda i: (0, 0)),    # b1
            pl.BlockSpec((Hp, 128), lambda i: (0, 0)),  # w2 (lane-padded, col 0 = w2)
            pl.BlockSpec((1, 1), lambda i: (0, 0)),     # b2
        ],
        out_specs=pl.BlockSpec((tb, 1), lambda i: (i, 0)),
        compiler_params=pltpu.CompilerParams(
            dimension_semantics=dim_semantics,
            vmem_limit_bytes=vmem_limit,
        ),
        cost_estimate=cost,
    )(x, w1_p, b1_p, w2_p, b2_p)
    return out


def init_params(key, input_size, hidden_size):
    """Deterministic init mimicking nn.Linear default (uniform +/- 1/sqrt(fan_in))."""
    k1, k2, k3, k4 = jax.random.split(key, 4)
    bound1 = 1.0 / jnp.sqrt(input_size)
    bound2 = 1.0 / jnp.sqrt(hidden_size)
    w1 = jax.random.uniform(k1, (input_size, hidden_size), jnp.float32, -bound1, bound1)
    b1 = jax.random.uniform(k2, (hidden_size,), jnp.float32, -bound1, bound1)
    w2 = jax.random.uniform(k3, (hidden_size,), jnp.float32, -bound2, bound2)
    b2 = jax.random.uniform(k4, (), jnp.float32, -bound2, bound2)
    return w1, b1, w2, b2


if __name__ == "__main__":
    batch = 777          # deliberately ragged: grid = ceil(777/256) = 4, partial last block
    input_size = 128
    hidden_size = 64     # padded to Hp = 128 inside the wrapper

    key = jax.random.PRNGKey(0)
    kx, kp = jax.random.split(key)
    x = jax.random.normal(kx, (batch, input_size), jnp.float32)
    w1, b1, w2, b2 = init_params(kp, input_size, hidden_size)

    # Small tile for the demo so the multi-step pipeline + ragged tail are exercised.
    out = neural_net2_forward(x, w1, b1, w2, b2, block_b=256)
    out = jax.block_until_ready(out)

    # Reference in plain JAX with the same bf16-on-MXU / f32-accumulate numerics.
    h_ref = jnp.maximum(
        jnp.dot(x.astype(jnp.bfloat16), w1.astype(jnp.bfloat16),
                preferred_element_type=jnp.float32) + b1[None, :], 0.0)
    z_ref = jnp.dot(h_ref.astype(jnp.bfloat16), w2.astype(jnp.bfloat16)[:, None],
                    preferred_element_type=jnp.float32) + b2
    ref = jax.nn.sigmoid(z_ref)

    assert out.shape == (batch, 1)
    max_err = float(jnp.max(jnp.abs(out - ref)))
    assert jnp.allclose(out, ref, atol=1e-4, rtol=1e-4), max_err

    print("KERNEL_OK")
</pallas_src>

<mosaic_0001>
module attributes {stable_mosaic.version = 11 : i64} {
  func.func @_mlp_kernel(%arg0: i32, %arg1: memref<256x128xf32, #tpu.memory_space<vmem>>, %arg2: memref<128x128xbf16, #tpu.memory_space<vmem>>, %arg3: memref<1x128xf32, #tpu.memory_space<vmem>>, %arg4: memref<128x128xbf16, #tpu.memory_space<vmem>>, %arg5: memref<1x1xf32, #tpu.memory_space<vmem>>, %arg6: memref<256x1xf32, #tpu.memory_space<vmem>>) attributes {dimension_semantics = [#tpu.dimension_semantics<arbitrary>], iteration_bounds = array<i64: 4>, scalar_prefetch = 0 : i64, scratch_operands = 0 : i64, tpu.core_type = #tpu.core_type<tc>, window_params = [{transform_indices = @transform_0, window_bounds = array<i64: 256, 128>}, {pipeline_mode = #tpu.pipeline_mode<synchronous>, transform_indices = @transform_1, window_bounds = array<i64: 128, 128>}, {pipeline_mode = #tpu.pipeline_mode<synchronous>, transform_indices = @transform_2, window_bounds = array<i64: 1, 128>}, {pipeline_mode = #tpu.pipeline_mode<synchronous>, transform_indices = @transform_3, window_bounds = array<i64: 128, 128>}, {pipeline_mode = #tpu.pipeline_mode<synchronous>, transform_indices = @transform_4, window_bounds = array<i64: 1, 1>}, {transform_indices = @transform_5, window_bounds = array<i64: 256, 1>}]} {
    %c0 = arith.constant 0 : index
    %c0_0 = arith.constant 0 : index
    %0 = vector.load %arg1[%c0, %c0_0] : memref<256x128xf32, #tpu.memory_space<vmem>>, vector<256x128xf32>
    %1 = arith.truncf %0 : vector<256x128xf32> to vector<256x128xbf16>
    %c0_1 = arith.constant 0 : index
    %c0_2 = arith.constant 0 : index
    %2 = vector.load %arg2[%c0_1, %c0_2] : memref<128x128xbf16, #tpu.memory_space<vmem>>, vector<128x128xbf16>
    %cst = arith.constant dense<0.000000e+00> : vector<256x128xf32>
    %3 = tpu.matmul %1, %2, %cst {dimension_numbers = #tpu.dot_dimension_numbers<[1], [0], [0], [1], [0, 0, 1, 1], [], []>} : vector<256x128xbf16>, vector<128x128xbf16>, vector<256x128xf32> -> vector<256x128xf32>
    %c0_3 = arith.constant 0 : index
    %c0_4 = arith.constant 0 : index
    %4 = vector.load %arg3[%c0_3, %c0_4] : memref<1x128xf32, #tpu.memory_space<vmem>>, vector<1x128xf32>
    %5 = vector.broadcast %4 : vector<1x128xf32> to vector<256x128xf32>
    %6 = arith.addf %3, %5 : vector<256x128xf32>
    %cst_5 = arith.constant 0.000000e+00 : f32
    %7 = vector.broadcast %cst_5 : f32 to vector<256x128xf32>
    %8 = arith.maximumf %6, %7 : vector<256x128xf32>
    %9 = arith.truncf %8 : vector<256x128xf32> to vector<256x128xbf16>
    %c0_6 = arith.constant 0 : index
    %c0_7 = arith.constant 0 : index
    %10 = vector.load %arg4[%c0_6, %c0_7] : memref<128x128xbf16, #tpu.memory_space<vmem>>, vector<128x128xbf16>
    %cst_8 = arith.constant dense<0.000000e+00> : vector<256x128xf32>
    %11 = tpu.matmul %9, %10, %cst_8 {dimension_numbers = #tpu.dot_dimension_numbers<[1], [0], [0], [1], [0, 0, 1, 1], [], []>} : vector<256x128xbf16>, vector<128x128xbf16>, vector<256x128xf32> -> vector<256x128xf32>
    %12 = vector.extract_strided_slice %11 {offsets = [0, 0], sizes = [256, 1], strides = [1, 1]} : vector<256x128xf32> to vector<256x1xf32>
    %c0_9 = arith.constant 0 : index
    %c0_10 = arith.constant 0 : index
    %13 = vector.load %arg5[%c0_9, %c0_10] : memref<1x1xf32, #tpu.memory_space<vmem>>, vector<1x1xf32>
    %14 = vector.broadcast %13 : vector<1x1xf32> to vector<256x1xf32>
    %15 = arith.addf %12, %14 : vector<256x1xf32>
    %16 = arith.negf %15 : vector<256x1xf32>
    %17 = math.exp %16 : vector<256x1xf32>
    %cst_11 = arith.constant 1.000000e+00 : f32
    %18 = vector.broadcast %cst_11 : f32 to vector<256x1xf32>
    %19 = arith.addf %18, %17 : vector<256x1xf32>
    %20 = arith.divf %18, %19 : vector<256x1xf32>
    %c0_12 = arith.constant 0 : index
    %c0_13 = arith.constant 0 : index
    %21 = vector.load %arg6[%c0_12, %c0_13] : memref<256x1xf32, #tpu.memory_space<vmem>>, vector<256x1xf32>
    tpu.vector_store %arg6[%c0_12, %c0_13], %20 {strides = array<i32>} : memref<256x1xf32, #tpu.memory_space<vmem>>, vector<256x1xf32>,
    return
  }
  func.func @transform_0(%arg0: i32) -> (i32, i32) {
    %c0_i32 = arith.constant 0 : i32
    %c0_i32_0 = arith.constant 0 : i32
    return %arg0, %c0_i32 : i32, i32
  }
  func.func @transform_1(%arg0: i32) -> (i32, i32) {
    %c0_i32 = arith.constant 0 : i32
    %c0_i32_0 = arith.constant 0 : i32
    %c0_i32_1 = arith.constant 0 : i32
    return %c0_i32, %c0_i32_0 : i32, i32
  }
  func.func @transform_2(%arg0: i32) -> (i32, i32) {
    %c0_i32 = arith.constant 0 : i32
    %c0_i32_0 = arith.constant 0 : i32
    %c0_i32_1 = arith.constant 0 : i32
    return %c0_i32, %c0_i32_0 : i32, i32
  }
  func.func @transform_3(%arg0: i32) -> (i32, i32) {
    %c0_i32 = arith.constant 0 : i32
    %c0_i32_0 = arith.constant 0 : i32
    %c0_i32_1 = arith.constant 0 : i32
    return %c0_i32, %c0_i32_0 : i32, i32
  }
  func.func @transform_4(%arg0: i32) -> (i32, i32) {
    %c0_i32 = arith.constant 0 : i32
    %c0_i32_0 = arith.constant 0 : i32
    %c0_i32_1 = arith.constant 0 : i32
    return %c0_i32, %c0_i32_0 : i32, i32
  }
  func.func @transform_5(%arg0: i32) -> (i32, i32) {
    %c0_i32 = arith.constant 0 : i32
    %c0_i32_0 = arith.constant 0 : i32
    return %arg0, %c0_i32 : i32, i32
  }
}

</mosaic_0001>

<llo_original>
// kernel: tpu_custom_call.1
$region0: #{tpu_custom_call.1}
  #allocation0 [shape = 'u32[]', space=smem, size = 0x4, offset = 0x4, fixed_abs, tag = 'smem constant byte address 0x4 - core index']
  #allocation1 [shape = 'u32[72,128]{1,0:T(1,128)}', space=vmem, size = 0x9000, scoped, tag = 'internal scratch']
  #allocation2 [shape = 'f32[1,1]{1,0:T(1,128)S(1)}', space=vmem, size = 0x200, scoped, tag = 'scoped memory for tpu_custom_call.1']
  %s0 = inlined_call_operand.hbm [shape: f32[777,128], index: 0, kind: input, shape index: {}]
  %s1 = inlined_call_operand.hbm [shape: bf16[128,128], index: 1, kind: input, shape index: {}]
  %s2 = inlined_call_operand.vmem [shape: f32[1,128], index: 2, kind: input, shape index: {}]
  %s3 = inlined_call_operand.hbm [shape: bf16[128,128], index: 3, kind: input, shape index: {}]
  %s4 = inlined_call_operand.<no memory space> [shape: f32[1,1], index: 4, kind: input, shape index: {}]
  %s5 = inlined_call_operand.vmem [shape: f32[777,1], index: 5, kind: output, shape index: {}]
  %s6 = sld [smem:[#allocation0]]
  $region113: #{tpu_custom_call.1} parent=0
    _
  %s8 = ssub.s32 1, %s6
  %s9 = scalar_select 0, %s8, %s6
  %v10 = vstv %s4
  %11 = vst [vmem:[#allocation2] sm:$0x1] %v10
  $region1: #{tpu_custom_call.1} parent=0
    #allocation3 [shape = 'u8[262144]{0}', space=vmem, size = 0x40000, scoped, tag = 'input window, operand 0']
    #allocation4 [shape = 's32[2]{0}', space=sflag, size = 0x8, scoped, tag = 'scoped memory for tpu_custom_call.1']
    #allocation5 [shape = 'u8[32768]{0}', space=vmem, size = 0x8000, scoped, tag = 'input window, operand 1, single buffered']
    #allocation6 [shape = 's32[1]{0}', space=sflag, size = 0x4, scoped, tag = 'scoped memory for tpu_custom_call.1']
    #allocation7 [shape = 'u8[32768]{0}', space=vmem, size = 0x8000, scoped, tag = 'input window, operand 3, single buffered']
    #allocation8 [shape = 'u8[262144]{0}', space=vmem, size = 0x40000, scoped, tag = 'output window, operand 0']
    %12 = vsyncpa [#allocation4], 0
    %s13 = scalar_lea.sflag [#allocation4], 1
    %14 = vsyncpa %s13, 0
    %15 = vsyncpa [#allocation6], 0
    loop: start=0, step=1, limit=6
    $region2: #{tpu_custom_call.1} parent=1 // loop_pre_header
      _
    $region3: #{tpu_custom_call.1} parent=1 // loop_header
      %s17 = sphi 0, %s21
      %p18 = scmp.ge.s32.totalorder %s17, 6
      %s27 = sphi 0, %s29
      %s30 = sphi 0, %s27
      %s31 = sphi 0, %s30
      %s47 = sphi 0, %s31
      %s51 = sphi 0, %s51
      %s53 = sphi 0, %s51
      %s54 = sphi 0, %s53
      %s68 = sphi 0, %s54
      %s72 = sphi 0, %s72
      %s74 = sphi 0, %s72
      %s75 = sphi 0, %s74
      %s89 = sphi 0, %s75
      %s93 = sphi 0, %s93
      %s95 = sphi 0, %s93
      %s96 = sphi 0, %s95
      %s110 = sphi 0, %s96
      %s114 = sphi 0, %s114
      %s116 = sphi 0, %s114
      %s117 = sphi 0, %s116
      %s131 = sphi 0, %s117
      %s137 = sphi 0, %s139
      %s140 = sphi 0, %s137
      %s141 = sphi 0, %s140
      %s157 = sphi 0, %s141
    $region4: #{tpu_custom_call.1} parent=1 // loop_header_branch
      %20 = sbr.rel (%p18) target = $region8
    $region5: #{tpu_custom_call.1} parent=1 // loop_body
      %s22 = ssub.s32 %s17, 1
      %s23 = ssub.s32 %s17, 2
      %s24 = sadd.s32 %s17, 1
      %s25 = ssub.s32 %s17, %s24
      %p26 = scmp.eq.s32.totalorder %s25, 0
      %s28 = sadd.s32 %s27, 1
      %s29 = scalar_select %p26, %s27, %s28
      %p32 = pneg %p26
      %p33 = scmp.eq.s32.totalorder %s17, 3
      %p34 = por %p32, %p33
      %p35 = scmp.ne.s32.totalorder %s27, %s30
      %p36 = scmp.eq.s32.totalorder %s17, 0
      %p37 = por %p35, %p36
      %p38 = scmp.ne.s32.totalorder %s27, %s30
      %p39 = scmp.eq.s32.totalorder %s22, 3
      %p40 = por %p38, %p39
      %p41 = scmp.ne.s32.totalorder %s30, %s31
      %p42 = scmp.eq.s32.totalorder %s22, 0
      %p43 = por %p41, %p42
      %p44 = scmp.ne.s32.totalorder %s30, %s31
      %p45 = scmp.eq.s32.totalorder %s23, 3
      %p46 = por %p44, %p45
      %p48 = scmp.ne.s32.totalorder %s31, %s47
      %p49 = scmp.eq.s32.totalorder %s23, 0
      %p50 = por %p48, %p49
      %s52 = sadd.s32 %s51, 1
      %p55 = scmp.eq.s32.totalorder %s17, 3
      %p56 = scmp.ne.s32.totalorder %s51, %s53
      %p57 = scmp.eq.s32.totalorder %s17, 0
      %p58 = por %p56, %p57
      %p59 = scmp.ne.s32.totalorder %s51, %s53
      %p60 = scmp.eq.s32.totalorder %s22, 3
      %p61 = por %p59, %p60
      %p62 = scmp.ne.s32.totalorder %s53, %s54
      %p63 = scmp.eq.s32.totalorder %s22, 0
      %p64 = por %p62, %p63
      %p65 = scmp.ne.s32.totalorder %s53, %s54
      %p66 = scmp.eq.s32.totalorder %s23, 3
      %p67 = por %p65, %p66
      %p69 = scmp.ne.s32.totalorder %s54, %s68
      %p70 = scmp.eq.s32.totalorder %s23, 0
      %p71 = por %p69, %p70
      %s73 = sadd.s32 %s72, 1
      %p76 = scmp.eq.s32.totalorder %s17, 3
      %p77 = scmp.ne.s32.totalorder %s72, %s74
      %p78 = scmp.eq.s32.totalorder %s17, 0
      %p79 = por %p77, %p78
      %p80 = scmp.ne.s32.totalorder %s72, %s74
      %p81 = scmp.eq.s32.totalorder %s22, 3
      %p82 = por %p80, %p81
      %p83 = scmp.ne.s32.totalorder %s74, %s75
      %p84 = scmp.eq.s32.totalorder %s22, 0
      %p85 = por %p83, %p84
      %p86 = scmp.ne.s32.totalorder %s74, %s75
      %p87 = scmp.eq.s32.totalorder %s23, 3
      %p88 = por %p86, %p87
      %p90 = scmp.ne.s32.totalorder %s75, %s89
      %p91 = scmp.eq.s32.totalorder %s23, 0
      %p92 = por %p90, %p91
      %s94 = sadd.s32 %s93, 1
      %p97 = scmp.eq.s32.totalorder %s17, 3
      %p98 = scmp.ne.s32.totalorder %s93, %s95
      %p99 = scmp.eq.s32.totalorder %s17, 0
      %p100 = por %p98, %p99
      %p101 = scmp.ne.s32.totalorder %s93, %s95
      %p102 = scmp.eq.s32.totalorder %s22, 3
      %p103 = por %p101, %p102
      %p104 = scmp.ne.s32.totalorder %s95, %s96
      %p105 = scmp.eq.s32.totalorder %s22, 0
      %p106 = por %p104, %p105
      %p107 = scmp.ne.s32.totalorder %s95, %s96
      %p108 = scmp.eq.s32.totalorder %s23, 3
      %p109 = por %p107, %p108
      %p111 = scmp.ne.s32.totalorder %s96, %s110
      %p112 = scmp.eq.s32.totalorder %s23, 0
      %p113 = por %p111, %p112
      %s115 = sadd.s32 %s114, 1
      %p118 = scmp.eq.s32.totalorder %s17, 3
      %p119 = scmp.ne.s32.totalorder %s114, %s116
      %p120 = scmp.eq.s32.totalorder %s17, 0
      %p121 = por %p119, %p120
      %p122 = scmp.ne.s32.totalorder %s114, %s116
      %p123 = scmp.eq.s32.totalorder %s22, 3
      %p124 = por %p122, %p123
      %p125 = scmp.ne.s32.totalorder %s116, %s117
      %p126 = scmp.eq.s32.totalorder %s22, 0
      %p127 = por %p125, %p126
      %p128 = scmp.ne.s32.totalorder %s116, %s117
      %p129 = scmp.eq.s32.totalorder %s23, 3
      %p130 = por %p128, %p129
      %p132 = scmp.ne.s32.totalorder %s117, %s131
      %p133 = scmp.eq.s32.totalorder %s23, 0
      %p134 = por %p132, %p133
      %s135 = ssub.s32 %s17, %s24
      %p136 = scmp.eq.s32.totalorder %s135, 0
      %s138 = sadd.s32 %s137, 1
      %s139 = scalar_select %p136, %s137, %s138
      %p142 = pneg %p136
      %p143 = scmp.eq.s32.totalorder %s17, 3
      %p144 = por %p142, %p143
      %p145 = scmp.ne.s32.totalorder %s137, %s140
      %p146 = scmp.eq.s32.totalorder %s17, 0
      %p147 = por %p145, %p146
      %p148 = scmp.ne.s32.totalorder %s137, %s140
      %p149 = scmp.eq.s32.totalorder %s22, 3
      %p150 = por %p148, %p149
      %p151 = scmp.ne.s32.totalorder %s140, %s141
      %p152 = scmp.eq.s32.totalorder %s22, 0
      %p153 = por %p151, %p152
      %p154 = scmp.ne.s32.totalorder %s140, %s141
      %p155 = scmp.eq.s32.totalorder %s23, 3
      %p156 = por %p154, %p155
      %p158 = scmp.ne.s32.totalorder %s141, %s157
      %p159 = scmp.eq.s32.totalorder %s23, 0
      %p160 = por %p158, %p159
      %p161 = scmp.le.s32.totalorder 1, %s17
      %p162 = scmp.lt.s32.totalorder %s17, 5
      %p163 = pnand %p161, %p162
      %p164 = pneg %p163
      // Predicated region
      $region9: #{tpu_custom_call.1} parent=5 // pred_check
        _
      $region10: #{tpu_custom_call.1} parent=5 // pred_check_branch
        %166 = sbr.rel (%p163) target = $region12
      $region11: #{tpu_custom_call.1} parent=5 // pred_region
        %s167 = ssub.s32 %s17, 1
        // Predicated region
        $region13: #{tpu_custom_call.1} parent=11 // pred_check
          %p168 = pneg %p64
        $region14: #{tpu_custom_call.1} parent=11 // pred_check_branch
          %170 = sbr.rel (%p168) target = $region16
        $region15: #{tpu_custom_call.1} parent=11 // pred_region
          %172 = vsyncadd [#allocation6], 0
          %s173 = sshll.u32 %s1, 4
          %s174 = int_to_ptr.hbm [resolvable:$true] %s173
          %s175 = sshll.u32 [#allocation5], 4
          %s176 = int_to_ptr.vmem [resolvable:$true] %s175
          %181 = dma.hbm_to_vmem [thread:$0]  %s174, 1024, %s176, [#allocation6], 64, 64, 4
        $region16: #{tpu_custom_call.1} parent=11 // pred_fallthru
          _
        // Predicated region
        $region17: #{tpu_custom_call.1} parent=11 // pred_check
          %p182 = pneg %p85
        $region18: #{tpu_custom_call.1} parent=11 // pred_check_branch
          %184 = sbr.rel (%p182) target = $region20
        $region19: #{tpu_custom_call.1} parent=11 // pred_region
          _
        $region20: #{tpu_custom_call.1} parent=11 // pred_fallthru
          _
        // Predicated region
        $region21: #{tpu_custom_call.1} parent=11 // pred_check
          %p185 = pneg %p106
        $region22: #{tpu_custom_call.1} parent=11 // pred_check_branch
          %187 = sbr.rel (%p185) target = $region24
        $region23: #{tpu_custom_call.1} parent=11 // pred_region
          %189 = vsyncadd [#allocation6], 0
          %s190 = sshll.u32 %s3, 4
          %s191 = int_to_ptr.hbm [resolvable:$true] %s190
          %s192 = sshll.u32 [#allocation7], 4
          %s193 = int_to_ptr.vmem [resolvable:$true] %s192
          %198 = dma.hbm_to_vmem [thread:$0]  %s191, 1024, %s193, [#allocation6], 64, 64, 4
        $region24: #{tpu_custom_call.1} parent=11 // pred_fallthru
          _
        // Predicated region
        $region25: #{tpu_custom_call.1} parent=11 // pred_check
          %p199 = pneg %p127
        $region26: #{tpu_custom_call.1} parent=11 // pred_check_branch
          %201 = sbr.rel (%p199) target = $region28
        $region27: #{tpu_custom_call.1} parent=11 // pred_region
          _
        $region28: #{tpu_custom_call.1} parent=11 // pred_fallthru
          _
      $region12: #{tpu_custom_call.1} parent=5 // pred_fallthru
        _
      %p202 = scmp.lt.s32.totalorder %s17, 4
      // Predicated region
      $region29: #{tpu_custom_call.1} parent=5 // pred_check
        %p203 = pneg %p202
      $region30: #{tpu_custom_call.1} parent=5 // pred_check_branch
        %205 = sbr.rel (%p203) target = $region32
      $region31: #{tpu_custom_call.1} parent=5 // pred_region
        // Predicated region
        $region33: #{tpu_custom_call.1} parent=31 // pred_check
          %p206 = pneg %p37
        $region34: #{tpu_custom_call.1} parent=31 // pred_check_branch
          %208 = sbr.rel (%p206) target = $region36
        $region35: #{tpu_custom_call.1} parent=31 // pred_region
          %s209 = sand.u32 %s27, 1
          %s210 = scalar_lea.sflag [#allocation4], %s209
          %s211 = sand.u32 %s27, 1
          %s212 = smul.addr %s211, 256
          %s213 = scalar_lea.vmem [#allocation3], %s212
          %s214 = smul.u32 32, %s17
          %s215 = ssub.s32 98, %s214
          %p216 = scmp.lt.s32.totalorder %s215, 32
          %s217 = scalar_select %p216, %s215, 32
          %s218 = smul.u32 8, %s217
          %s219 = ssub.s32 256, %s218
          %s220 = sshll.u32 %s219, 4
          %221 = vsyncadd %s210, %s220
          %p222 = scmp.ne.s32.totalorder 0, %s218
          %s223 = smul.addr %s214, 8
          %s224 = scalar_lea.hbm %s0, %s223
          %s225 = smul.u32 8, %s217
          %s226 = sshll.u32 %s224, 4
          %s227 = int_to_ptr.hbm [resolvable:$true] %s226
          %s228 = sshll.u32 %s213, 4
          %s229 = int_to_ptr.vmem [resolvable:$true] %s228
          %s230 = sshll.u32 %s225, 4
          %234 = dma.hbm_to_vmem [thread:$0]  (%p222), %s227, %s230, %s229, %s210, 128, 128, 8
        $region36: #{tpu_custom_call.1} parent=31 // pred_fallthru
          _
      $region32: #{tpu_custom_call.1} parent=5 // pred_fallthru
        _
      %p235 = scmp.le.s32.totalorder 1, %s17
      %p236 = scmp.lt.s32.totalorder %s17, 5
      %p237 = pnand %p235, %p236
      %p238 = pneg %p237
      // Predicated region
      $region37: #{tpu_custom_call.1} parent=5 // pred_check
        _
      $region38: #{tpu_custom_call.1} parent=5 // pred_check_branch
        %240 = sbr.rel (%p237) target = $region40
      $region39: #{tpu_custom_call.1} parent=5 // pred_region
        %s241 = ssub.s32 %s17, 1
        %s242 = sand.u32 %s30, 1
        %s243 = scalar_lea.sflag [#allocation4], %s242
        %s244 = sand.u32 %s30, 1
        %s245 = smul.addr %s244, 256
        %s246 = scalar_lea.vmem [#allocation3], %s245
        // Predicated region
        $region41: #{tpu_custom_call.1} parent=39 // pred_check
          %p247 = pneg %p43
        $region42: #{tpu_custom_call.1} parent=39 // pred_check_branch
          %249 = sbr.rel (%p247) target = $region44
        $region43: #{tpu_custom_call.1} parent=39 // pred_region
          %251 = dma.done %s243, 4096
        $region44: #{tpu_custom_call.1} parent=39 // pred_fallthru
          _
        // Predicated region
        $region45: #{tpu_custom_call.1} parent=39 // pred_check
          %p252 = pneg %p64
        $region46: #{tpu_custom_call.1} parent=39 // pred_check_branch
          %254 = sbr.rel (%p252) target = $region48
        $region47: #{tpu_custom_call.1} parent=39 // pred_region
          %256 = dma.done [#allocation6], 1024
        $region48: #{tpu_custom_call.1} parent=39 // pred_fallthru
          _
        // Predicated region
        $region49: #{tpu_custom_call.1} parent=39 // pred_check
          %p257 = pneg %p106
        $region50: #{tpu_custom_call.1} parent=39 // pred_check_branch
          %259 = sbr.rel (%p257) target = $region52
        $region51: #{tpu_custom_call.1} parent=39 // pred_region
          %261 = dma.done [#allocation6], 1024
        $region52: #{tpu_custom_call.1} parent=39 // pred_fallthru
          _
        %s262 = sand.u32 %s30, 1
        %s263 = scalar_lea.sflag [#allocation4], %s262
        %s264 = sand.u32 %s30, 1
        %s265 = smul.addr %s264, 256
        %s266 = scalar_lea.vmem [#allocation3], %s265
        %p267 = pneg %p43
        %p268 = pneg %p40
        %p269 = pneg %p64
        %p270 = pneg %p61
        %p271 = pneg %p85
        %p272 = pneg %p82
        %p273 = pneg %p106
        %p274 = pneg %p103
        %p275 = pneg %p127
        %p276 = pneg %p124
        %p277 = pneg %p153
        %p278 = pneg %p150
        %s279 = sand.u32 %s140, 1
        %s280 = sand.u32 %s140, 1
        %s281 = smul.addr %s280, 256
        %s282 = scalar_lea.vmem [#allocation8], %s281
        %s283 = smul.u32 32, %s22
        %s284 = ssub.s32 98, %s283
        %p285 = scmp.lt.s32.totalorder %s284, 32
        %s286 = scalar_select %p285, %s284, 32
        %s287 = smul.u32 8, %s286
        %s288 = smul.u32 32, %s22
        %s289 = ssub.s32 98, %s288
        %p290 = scmp.lt.s32.totalorder %s289, 32
        %s291 = scalar_select %p290, %s289, 32
        %s292 = smul.u32 8, %s291
        %v293 = vld [vmem:[%s246] sm:$0xff]
        %v294 = vld [vmem:[%s246 + $0x8] sm:$0xff]
        %v295 = vld [vmem:[%s246 + $0x10] sm:$0xff]
        %v296 = vld [vmem:[%s246 + $0x18] sm:$0xff]
        %v297 = vld [vmem:[%s246 + $0x20] sm:$0xff]
        %v298 = vld [vmem:[%s246 + $0x28] sm:$0xff]
        %v299 = vld [vmem:[%s246 + $0x30] sm:$0xff]
        %v300 = vld [vmem:[%s246 + $0x38] sm:$0xff]
        %v301 = vld [vmem:[%s246 + $0x40] sm:$0xff]
        %v302 = vld [vmem:[%s246 + $0x48] sm:$0xff]
        %v303 = vld [vmem:[%s246 + $0x50] sm:$0xff]
        %v304 = vld [vmem:[%s246 + $0x58] sm:$0xff]
        %v305 = vld [vmem:[%s246 + $0x60] sm:$0xff]
        %v306 = vld [vmem:[%s246 + $0x68] sm:$0xff]
        %v307 = vld [vmem:[%s246 + $0x70] sm:$0xff]
        %v308 = vld [vmem:[%s246 + $0x78] sm:$0xff]
        %v309 = vld [vmem:[%s246 + $0x80] sm:$0xff]
        %v310 = vld [vmem:[%s246 + $0x88] sm:$0xff]
        %v311 = vld [vmem:[%s246 + $0x90] sm:$0xff]
        %v312 = vld [vmem:[%s246 + $0x98] sm:$0xff]
        %v313 = vld [vmem:[%s246 + $0xa0] sm:$0xff]
        %v314 = vld [vmem:[%s246 + $0xa8] sm:$0xff]
        %v315 = vld [vmem:[%s246 + $0xb0] sm:$0xff]
        %v316 = vld [vmem:[%s246 + $0xb8] sm:$0xff]
        %v317 = vld [vmem:[%s246 + $0xc0] sm:$0xff]
        %v318 = vld [vmem:[%s246 + $0xc8] sm:$0xff]
        %v319 = vld [vmem:[%s246 + $0xd0] sm:$0xff]
        %v320 = vld [vmem:[%s246 + $0xd8] sm:$0xff]
        %v321 = vld [vmem:[%s246 + $0xe0] sm:$0xff]
        %v322 = vld [vmem:[%s246 + $0xe8] sm:$0xff]
        %v323 = vld [vmem:[%s246 + $0xf0] sm:$0xff]
        %v324 = vld [vmem:[%s246 + $0xf8] sm:$0xff]
        %v325 = vpack.c.bf16 %v294, %v293
        %v326 = vpack.c.bf16 %v296, %v295
        %v327 = vpack.c.bf16 %v298, %v297
        %v328 = vpack.c.bf16 %v300, %v299
        %v329 = vpack.c.bf16 %v302, %v301
        %v330 = vpack.c.bf16 %v304, %v303
        %v331 = vpack.c.bf16 %v306, %v305
        %v332 = vpack.c.bf16 %v308, %v307
        %v333 = vpack.c.bf16 %v310, %v309
        %v334 = vpack.c.bf16 %v312, %v311
        %v335 = vpack.c.bf16 %v314, %v313
        %v336 = vpack.c.bf16 %v316, %v315
        %v337 = vpack.c.bf16 %v318, %v317
        %v338 = vpack.c.bf16 %v320, %v319
        %v339 = vpack.c.bf16 %v322, %v321
        %v340 = vpack.c.bf16 %v324, %v323
        %v341 = vld [vmem:[#allocation5] sm:$0xf]
        %v342 = vld [vmem:[#allocation5 + $0x4] sm:$0xf]
        %v343 = vld [vmem:[#allocation5 + $0x8] sm:$0xf]
        %v344 = vld [vmem:[#allocation5 + $0xc] sm:$0xf]
        %v345 = vld [vmem:[#allocation5 + $0x10] sm:$0xf]
        %v346 = vld [vmem:[#allocation5 + $0x14] sm:$0xf]
        %v347 = vld [vmem:[#allocation5 + $0x18] sm:$0xf]
        %v348 = vld [vmem:[#allocation5 + $0x1c] sm:$0xf]
        %v349 = vld [vmem:[#allocation5 + $0x20] sm:$0xf]
        %v350 = vld [vmem:[#allocation5 + $0x24] sm:$0xf]
        %v351 = vld [vmem:[#allocation5 + $0x28] sm:$0xf]
        %v352 = vld [vmem:[#allocation5 + $0x2c] sm:$0xf]
        %v353 = vld [vmem:[#allocation5 + $0x30] sm:$0xf]
        %v354 = vld [vmem:[#allocation5 + $0x34] sm:$0xf]
        %v355 = vld [vmem:[#allocation5 + $0x38] sm:$0xf]
        %v356 = vld [vmem:[#allocation5 + $0x3c] sm:$0xf]
        %v357 = vld [vmem:[%s2] sm:$0x1]
        %v359 = vperm.slane %v357, 0
        %v377 = vunpack.c.l.b16 %v341
        %v378 = vunpack.c.l.b16 %v342
        %v379 = vunpack.c.l.b16 %v343
        %v380 = vunpack.c.l.b16 %v344
        %v381 = vunpack.c.l.b16 %v345
        %v382 = vunpack.c.l.b16 %v346
        %v383 = vunpack.c.l.b16 %v347
        %v384 = vunpack.c.l.b16 %v348
        %v385 = vunpack.c.l.b16 %v349
        %v386 = vunpack.c.l.b16 %v350
        %v387 = vunpack.c.l.b16 %v351
        %v388 = vunpack.c.l.b16 %v352
        %v389 = vunpack.c.l.b16 %v353
        %v390 = vunpack.c.l.b16 %v354
        %v391 = vunpack.c.l.b16 %v355
        %v392 = vunpack.c.l.b16 %v356
        %v393 = vpack.c.b16 %v378, %v377
        %v394 = vpack.c.b16 %v380, %v379
        %v395 = vpack.c.b16 %v382, %v381
        %v396 = vpack.c.b16 %v384, %v383
        %v397 = vpack.c.b16 %v386, %v385
        %v398 = vpack.c.b16 %v388, %v387
        %v399 = vpack.c.b16 %v390, %v389
        %v400 = vpack.c.b16 %v392, %v391
        %409 = vmatpush.bf16.msra.mxu0 %v400
        %410 = vmatpush.bf16.msra.mxu0 %v399
        %411 = vmatpush.bf16.msra.mxu0 %v398
        %412 = vmatpush.bf16.msra.mxu0 %v397
        %413 = vmatpush.bf16.msra.mxu0 %v396
        %414 = vmatpush.bf16.msra.mxu0 %v395
        %415 = vmatpush.bf16.msra.mxu0 %v394
        %416 = vmatpush.bf16.msra.mxu0 %v393
        %417 = vmatmul.bf16.gmra.mxu0 %v325
        %v418 = vpop.f32.mrf.mxu0
        %v419 = vadd.f32 %v359, %v418
        %v420 = vpop.f32.mrf.mxu0
        %v421 = vadd.f32 %v359, %v420
        %422 = vmatmul.bf16.gmra.mxu0 %v326
        %v423 = vpop.f32.mrf.mxu0
        %v424 = vadd.f32 %v359, %v423
        %v425 = vpop.f32.mrf.mxu0
        %v426 = vadd.f32 %v359, %v425
        %427 = vmatmul.bf16.gmra.mxu0 %v327
        %v428 = vpop.f32.mrf.mxu0
        %v429 = vadd.f32 %v359, %v428
        %v430 = vpop.f32.mrf.mxu0
        %v431 = vadd.f32 %v359, %v430
        %432 = vmatmul.bf16.gmra.mxu0 %v328
        %v433 = vpop.f32.mrf.mxu0
        %v434 = vadd.f32 %v359, %v433
        %v435 = vpop.f32.mrf.mxu0
        %v436 = vadd.f32 %v359, %v435
        %437 = vmatmul.bf16.gmra.mxu0 %v329
        %v438 = vpop.f32.mrf.mxu0
        %v439 = vadd.f32 %v359, %v438
        %v440 = vpop.f32.mrf.mxu0
        %v441 = vadd.f32 %v359, %v440
        %442 = vmatmul.bf16.gmra.mxu0 %v330
        %v443 = vpop.f32.mrf.mxu0
        %v444 = vadd.f32 %v359, %v443
        %v445 = vpop.f32.mrf.mxu0
        %v446 = vadd.f32 %v359, %v445
        %447 = vmatmul.bf16.gmra.mxu0 %v331
        %v448 = vpop.f32.mrf.mxu0
        %v449 = vadd.f32 %v359, %v448
        %v450 = vpop.f32.mrf.mxu0
        %v451 = vadd.f32 %v359, %v450
        %452 = vmatmul.bf16.gmra.mxu0 %v332
        %v453 = vpop.f32.mrf.mxu0
        %v454 = vadd.f32 %v359, %v453
        %v455 = vpop.f32.mrf.mxu0
        %v456 = vadd.f32 %v359, %v455
        %457 = vmatmul.bf16.gmra.mxu0 %v333
        %v458 = vpop.f32.mrf.mxu0
        %v459 = vadd.f32 %v359, %v458
        %v460 = vpop.f32.mrf.mxu0
        %v461 = vadd.f32 %v359, %v460
        %462 = vmatmul.bf16.gmra.mxu0 %v334
        %v463 = vpop.f32.mrf.mxu0
        %v464 = vadd.f32 %v359, %v463
        %v465 = vpop.f32.mrf.mxu0
        %v466 = vadd.f32 %v359, %v465
        %467 = vmatmul.bf16.gmra.mxu0 %v335
        %v468 = vpop.f32.mrf.mxu0
        %v469 = vadd.f32 %v359, %v468
        %v470 = vpop.f32.mrf.mxu0
        %v471 = vadd.f32 %v359, %v470
        %472 = vmatmul.bf16.gmra.mxu0 %v336
        %v473 = vpop.f32.mrf.mxu0
        %v474 = vadd.f32 %v359, %v473
        %v475 = vpop.f32.mrf.mxu0
        %v476 = vadd.f32 %v359, %v475
        %477 = vmatmul.bf16.gmra.mxu0 %v337
        %v478 = vpop.f32.mrf.mxu0
        %v479 = vadd.f32 %v359, %v478
        %v480 = vpop.f32.mrf.mxu0
        %v481 = vadd.f32 %v359, %v480
        %482 = vmatmul.bf16.gmra.mxu0 %v338
        %v483 = vpop.f32.mrf.mxu0
        %v484 = vadd.f32 %v359, %v483
        %v485 = vpop.f32.mrf.mxu0
        %v486 = vadd.f32 %v359, %v485
        %487 = vmatmul.bf16.gmra.mxu0 %v339
        %v488 = vpop.f32.mrf.mxu0
        %v489 = vadd.f32 %v359, %v488
        %v490 = vpop.f32.mrf.mxu0
        %v491 = vadd.f32 %v359, %v490
        %492 = vmatmul.bf16.gmra.mxu0 %v340
        %v493 = vpop.f32.mrf.mxu0
        %v494 = vadd.f32 %v359, %v493
        %v495 = vpop.f32.mrf.mxu0
        %v496 = vadd.f32 %v359, %v495
        %497 = vdwg.mxu0
        %v498 = vmax.f32 %v419, 0.0
        %v499 = vmax.f32 %v421, 0.0
        %v500 = vmax.f32 %v424, 0.0
        %v501 = vmax.f32 %v426, 0.0
        %v502 = vmax.f32 %v429, 0.0
        %v503 = vmax.f32 %v431, 0.0
        %v504 = vmax.f32 %v434, 0.0
        %v505 = vmax.f32 %v436, 0.0
        %v506 = vmax.f32 %v439, 0.0
        %v507 = vmax.f32 %v441, 0.0
        %v508 = vmax.f32 %v444, 0.0
        %v509 = vmax.f32 %v446, 0.0
        %v510 = vmax.f32 %v449, 0.0
        %v511 = vmax.f32 %v451, 0.0
        %v512 = vmax.f32 %v454, 0.0
        %v513 = vmax.f32 %v456, 0.0
        %v514 = vmax.f32 %v459, 0.0
        %v515 = vmax.f32 %v461, 0.0
        %v516 = vmax.f32 %v464, 0.0
        %v517 = vmax.f32 %v466, 0.0
        %v518 = vmax.f32 %v469, 0.0
        %v519 = vmax.f32 %v471, 0.0
        %v520 = vmax.f32 %v474, 0.0
        %v521 = vmax.f32 %v476, 0.0
        %v522 = vmax.f32 %v479, 0.0
        %v523 = vmax.f32 %v481, 0.0
        %v524 = vmax.f32 %v484, 0.0
        %v525 = vmax.f32 %v486, 0.0
        %v526 = vmax.f32 %v489, 0.0
        %v527 = vmax.f32 %v491, 0.0
        %v528 = vmax.f32 %v494, 0.0
        %v529 = vmax.f32 %v496, 0.0
        %v530 = vpack.c.bf16 %v499, %v498
        %v531 = vpack.c.bf16 %v501, %v500
        %v532 = vpack.c.bf16 %v503, %v502
        %v533 = vpack.c.bf16 %v505, %v504
        %v534 = vpack.c.bf16 %v507, %v506
        %v535 = vpack.c.bf16 %v509, %v508
        %v536 = vpack.c.bf16 %v511, %v510
        %v537 = vpack.c.bf16 %v513, %v512
        %v538 = vpack.c.bf16 %v515, %v514
        %v539 = vpack.c.bf16 %v517, %v516
        %v540 = vpack.c.bf16 %v519, %v518
        %v541 = vpack.c.bf16 %v521, %v520
        %v542 = vpack.c.bf16 %v523, %v522
        %v543 = vpack.c.bf16 %v525, %v524
        %v544 = vpack.c.bf16 %v527, %v526
        %v545 = vpack.c.bf16 %v529, %v528
        %v546 = vld [vmem:[#allocation7] sm:$0xf]
        %v547 = vld [vmem:[#allocation7 + $0x4] sm:$0xf]
        %v548 = vld [vmem:[#allocation7 + $0x8] sm:$0xf]
        %v549 = vld [vmem:[#allocation7 + $0xc] sm:$0xf]
        %v550 = vld [vmem:[#allocation7 + $0x10] sm:$0xf]
        %v551 = vld [vmem:[#allocation7 + $0x14] sm:$0xf]
        %v552 = vld [vmem:[#allocation7 + $0x18] sm:$0xf]
        %v553 = vld [vmem:[#allocation7 + $0x1c] sm:$0xf]
        %v554 = vld [vmem:[#allocation7 + $0x20] sm:$0xf]
        %v555 = vld [vmem:[#allocation7 + $0x24] sm:$0xf]
        %v556 = vld [vmem:[#allocation7 + $0x28] sm:$0xf]
        %v557 = vld [vmem:[#allocation7 + $0x2c] sm:$0xf]
        %v558 = vld [vmem:[#allocation7 + $0x30] sm:$0xf]
        %v559 = vld [vmem:[#allocation7 + $0x34] sm:$0xf]
        %v560 = vld [vmem:[#allocation7 + $0x38] sm:$0xf]
        %v561 = vld [vmem:[#allocation7 + $0x3c] sm:$0xf]
        %v578 = vunpack.c.l.b16 %v546
        %v579 = vunpack.c.l.b16 %v547
        %v580 = vunpack.c.l.b16 %v548
        %v581 = vunpack.c.l.b16 %v549
        %v582 = vunpack.c.l.b16 %v550
        %v583 = vunpack.c.l.b16 %v551
        %v584 = vunpack.c.l.b16 %v552
        %v585 = vunpack.c.l.b16 %v553
        %v586 = vunpack.c.l.b16 %v554
        %v587 = vunpack.c.l.b16 %v555
        %v588 = vunpack.c.l.b16 %v556
        %v589 = vunpack.c.l.b16 %v557
        %v590 = vunpack.c.l.b16 %v558
        %v591 = vunpack.c.l.b16 %v559
        %v592 = vunpack.c.l.b16 %v560
        %v593 = vunpack.c.l.b16 %v561
        %v594 = vpack.c.b16 %v579, %v578
        %v595 = vpack.c.b16 %v581, %v580
        %v596 = vpack.c.b16 %v583, %v582
        %v597 = vpack.c.b16 %v585, %v584
        %v598 = vpack.c.b16 %v587, %v586
        %v599 = vpack.c.b16 %v589, %v588
        %v600 = vpack.c.b16 %v591, %v590
        %v601 = vpack.c.b16 %v593, %v592
        %610 = vmatpush.bf16.msra.mxu0 %v601
        %611 = vmatpush.bf16.msra.mxu0 %v600
        %612 = vmatpush.bf16.msra.mxu0 %v599
        %613 = vmatpush.bf16.msra.mxu0 %v598
        %614 = vmatpush.bf16.msra.mxu0 %v597
        %615 = vmatpush.bf16.msra.mxu0 %v596
        %616 = vmatpush.bf16.msra.mxu0 %v595
        %617 = vmatpush.bf16.msra.mxu0 %v594
        %618 = vmatmul.bf16.gmra.mxu0 %v530
        %v619 = vpop.f32.mrf.mxu0
        %v620 = vadd.f32 0.0, %v619
        %v621 = vpop.f32.mrf.mxu0
        %v622 = vadd.f32 0.0, %v621
        %623 = vmatmul.bf16.gmra.mxu0 %v531
        %v624 = vpop.f32.mrf.mxu0
        %v625 = vadd.f32 0.0, %v624
        %v626 = vpop.f32.mrf.mxu0
        %v627 = vadd.f32 0.0, %v626
        %628 = vmatmul.bf16.gmra.mxu0 %v532
        %v629 = vpop.f32.mrf.mxu0
        %v630 = vadd.f32 0.0, %v629
        %v631 = vpop.f32.mrf.mxu0
        %v632 = vadd.f32 0.0, %v631
        %633 = vmatmul.bf16.gmra.mxu0 %v533
        %v634 = vpop.f32.mrf.mxu0
        %v635 = vadd.f32 0.0, %v634
        %v636 = vpop.f32.mrf.mxu0
        %v637 = vadd.f32 0.0, %v636
        %638 = vmatmul.bf16.gmra.mxu0 %v534
        %v639 = vpop.f32.mrf.mxu0
        %v640 = vadd.f32 0.0, %v639
        %v641 = vpop.f32.mrf.mxu0
        %v642 = vadd.f32 0.0, %v641
        %643 = vmatmul.bf16.gmra.mxu0 %v535
        %v644 = vpop.f32.mrf.mxu0
        %v645 = vadd.f32 0.0, %v644
        %v646 = vpop.f32.mrf.mxu0
        %v647 = vadd.f32 0.0, %v646
        %648 = vmatmul.bf16.gmra.mxu0 %v536
        %v649 = vpop.f32.mrf.mxu0
        %v650 = vadd.f32 0.0, %v649
        %v651 = vpop.f32.mrf.mxu0
        %v652 = vadd.f32 0.0, %v651
        %653 = vmatmul.bf16.gmra.mxu0 %v537
        %v654 = vpop.f32.mrf.mxu0
        %v655 = vadd.f32 0.0, %v654
        %v656 = vpop.f32.mrf.mxu0
        %v657 = vadd.f32 0.0, %v656
        %658 = vmatmul.bf16.gmra.mxu0 %v538
        %v659 = vpop.f32.mrf.mxu0
        %v660 = vadd.f32 0.0, %v659
        %v661 = vpop.f32.mrf.mxu0
        %v662 = vadd.f32 0.0, %v661
        %663 = vmatmul.bf16.gmra.mxu0 %v539
        %v664 = vpop.f32.mrf.mxu0
        %v665 = vadd.f32 0.0, %v664
        %v666 = vpop.f32.mrf.mxu0
        %v667 = vadd.f32 0.0, %v666
        %668 = vmatmul.bf16.gmra.mxu0 %v540
        %v669 = vpop.f32.mrf.mxu0
        %v670 = vadd.f32 0.0, %v669
        %v671 = vpop.f32.mrf.mxu0
        %v672 = vadd.f32 0.0, %v671
        %673 = vmatmul.bf16.gmra.mxu0 %v541
        %v674 = vpop.f32.mrf.mxu0
        %v675 = vadd.f32 0.0, %v674
        %v676 = vpop.f32.mrf.mxu0
        %v677 = vadd.f32 0.0, %v676
        %678 = vmatmul.bf16.gmra.mxu0 %v542
        %v679 = vpop.f32.mrf.mxu0
        %v680 = vadd.f32 0.0, %v679
        %v681 = vpop.f32.mrf.mxu0
        %v682 = vadd.f32 0.0, %v681
        %683 = vmatmul.bf16.gmra.mxu0 %v543
        %v684 = vpop.f32.mrf.mxu0
        %v685 = vadd.f32 0.0, %v684
        %v686 = vpop.f32.mrf.mxu0
        %v687 = vadd.f32 0.0, %v686
        %688 = vmatmul.bf16.gmra.mxu0 %v544
        %v689 = vpop.f32.mrf.mxu0
        %v690 = vadd.f32 0.0, %v689
        %v691 = vpop.f32.mrf.mxu0
        %v692 = vadd.f32 0.0, %v691
        %693 = vmatmul.bf16.gmra.mxu0 %v545
        %v694 = vpop.f32.mrf.mxu0
        %v695 = vadd.f32 0.0, %v694
        %v696 = vpop.f32.mrf.mxu0
        %v697 = vadd.f32 0.0, %v696
        %698 = vdwg.mxu0
        %v699 = vld [vmem:[#allocation2] sm:$0x1]
        %v701 = vperm.slane %v699, 0
        %v703 = vadd.f32 %v620, %v701
        %v704 = vadd.f32 %v622, %v701
        %v705 = vadd.f32 %v625, %v701
        %v706 = vadd.f32 %v627, %v701
        %v707 = vadd.f32 %v630, %v701
        %v708 = vadd.f32 %v632, %v701
        %v709 = vadd.f32 %v635, %v701
        %v710 = vadd.f32 %v637, %v701
        %v711 = vadd.f32 %v640, %v701
        %v712 = vadd.f32 %v642, %v701
        %v713 = vadd.f32 %v645, %v701
        %v714 = vadd.f32 %v647, %v701
        %v715 = vadd.f32 %v650, %v701
        %v716 = vadd.f32 %v652, %v701
        %v717 = vadd.f32 %v655, %v701
        %v718 = vadd.f32 %v657, %v701
        %v719 = vadd.f32 %v660, %v701
        %v720 = vadd.f32 %v662, %v701
        %v721 = vadd.f32 %v665, %v701
        %v722 = vadd.f32 %v667, %v701
        %v723 = vadd.f32 %v670, %v701
        %v724 = vadd.f32 %v672, %v701
        %v725 = vadd.f32 %v675, %v701
        %v726 = vadd.f32 %v677, %v701
        %v727 = vadd.f32 %v680, %v701
        %v728 = vadd.f32 %v682, %v701
        %v729 = vadd.f32 %v685, %v701
        %v730 = vadd.f32 %v687, %v701
        %v731 = vadd.f32 %v690, %v701
        %v732 = vadd.f32 %v692, %v701
        %v733 = vadd.f32 %v695, %v701
        %v734 = vadd.f32 %v697, %v701
        %v735 = vxor.u32 %v703, 2147483648
        %v736 = vxor.u32 %v704, 2147483648
        %v737 = vxor.u32 %v705, 2147483648
        %v738 = vxor.u32 %v706, 2147483648
        %v739 = vxor.u32 %v707, 2147483648
        %v740 = vxor.u32 %v708, 2147483648
        %v741 = vxor.u32 %v709, 2147483648
        %v742 = vxor.u32 %v710, 2147483648
        %v743 = vxor.u32 %v711, 2147483648
        %v744 = vxor.u32 %v712, 2147483648
        %v745 = vxor.u32 %v713, 2147483648
        %v746 = vxor.u32 %v714, 2147483648
        %v747 = vxor.u32 %v715, 2147483648
        %v748 = vxor.u32 %v716, 2147483648
        %v749 = vxor.u32 %v717, 2147483648
        %v750 = vxor.u32 %v718, 2147483648
        %v751 = vxor.u32 %v719, 2147483648
        %v752 = vxor.u32 %v720, 2147483648
        %v753 = vxor.u32 %v721, 2147483648
        %v754 = vxor.u32 %v722, 2147483648
        %v755 = vxor.u32 %v723, 2147483648
        %v756 = vxor.u32 %v724, 2147483648
        %v757 = vxor.u32 %v725, 2147483648
        %v758 = vxor.u32 %v726, 2147483648
        %v759 = vxor.u32 %v727, 2147483648
        %v760 = vxor.u32 %v728, 2147483648
        %v761 = vxor.u32 %v729, 2147483648
        %v762 = vxor.u32 %v730, 2147483648
        %v763 = vxor.u32 %v731, 2147483648
        %v764 = vxor.u32 %v732, 2147483648
        %v765 = vxor.u32 %v733, 2147483648
        %v766 = vxor.u32 %v734, 2147483648
        %v767 = vmul.f32 %v735, 1.442695
        %v768 = vpow.pop %v767
        %v769 = vmul.f32 %v736, 1.442695
        %v770 = vpow.pop %v769
        %v771 = vmul.f32 %v737, 1.442695
        %v772 = vpow.pop %v771
        %v773 = vmul.f32 %v738, 1.442695
        %v774 = vpow.pop %v773
        %v775 = vmul.f32 %v739, 1.442695
        %v776 = vpow.pop %v775
        %v777 = vmul.f32 %v740, 1.442695
        %v778 = vpow.pop %v777
        %v779 = vmul.f32 %v741, 1.442695
        %v780 = vpow.pop %v779
        %v781 = vmul.f32 %v742, 1.442695
        %v782 = vpow.pop %v781
        %v783 = vmul.f32 %v743, 1.442695
        %v784 = vpow.pop %v783
        %v785 = vmul.f32 %v744, 1.442695
        %v786 = vpow.pop %v785
        %v787 = vmul.f32 %v745, 1.442695
        %v788 = vpow.pop %v787
        %v789 = vmul.f32 %v746, 1.442695
        %v790 = vpow.pop %v789
        %v791 = vmul.f32 %v747, 1.442695
        %v792 = vpow.pop %v791
        %v793 = vmul.f32 %v748, 1.442695
        %v794 = vpow.pop %v793
        %v795 = vmul.f32 %v749, 1.442695
        %v796 = vpow.pop %v795
        %v797 = vmul.f32 %v750, 1.442695
        %v798 = vpow.pop %v797
        %v799 = vmul.f32 %v751, 1.442695
        %v800 = vpow.pop %v799
        %v801 = vmul.f32 %v752, 1.442695
        %v802 = vpow.pop %v801
        %v803 = vmul.f32 %v753, 1.442695
        %v804 = vpow.pop %v803
        %v805 = vmul.f32 %v754, 1.442695
        %v806 = vpow.pop %v805
        %v807 = vmul.f32 %v755, 1.442695
        %v808 = vpow.pop %v807
        %v809 = vmul.f32 %v756, 1.442695
        %v810 = vpow.pop %v809
        %v811 = vmul.f32 %v757, 1.442695
        %v812 = vpow.pop %v811
        %v813 = vmul.f32 %v758, 1.442695
        %v814 = vpow.pop %v813
        %v815 = vmul.f32 %v759, 1.442695
        %v816 = vpow.pop %v815
        %v817 = vmul.f32 %v760, 1.442695
        %v818 = vpow.pop %v817
        %v819 = vmul.f32 %v761, 1.442695
        %v820 = vpow.pop %v819
        %v821 = vmul.f32 %v762, 1.442695
        %v822 = vpow.pop %v821
        %v823 = vmul.f32 %v763, 1.442695
        %v824 = vpow.pop %v823
        %v825 = vmul.f32 %v764, 1.442695
        %v826 = vpow.pop %v825
        %v827 = vmul.f32 %v765, 1.442695
        %v828 = vpow.pop %v827
        %v829 = vmul.f32 %v766, 1.442695
        %v830 = vpow.pop %v829
        %v831 = vadd.f32 %v768, 1.0
        %v832 = vadd.f32 %v770, 1.0
        %v833 = vadd.f32 %v772, 1.0
        %v834 = vadd.f32 %v774, 1.0
        %v835 = vadd.f32 %v776, 1.0
        %v836 = vadd.f32 %v778, 1.0
        %v837 = vadd.f32 %v780, 1.0
        %v838 = vadd.f32 %v782, 1.0
        %v839 = vadd.f32 %v784, 1.0
        %v840 = vadd.f32 %v786, 1.0
        %v841 = vadd.f32 %v788, 1.0
        %v842 = vadd.f32 %v790, 1.0
        %v843 = vadd.f32 %v792, 1.0
        %v844 = vadd.f32 %v794, 1.0
        %v845 = vadd.f32 %v796, 1.0
        %v846 = vadd.f32 %v798, 1.0
        %v847 = vadd.f32 %v800, 1.0
        %v848 = vadd.f32 %v802, 1.0
        %v849 = vadd.f32 %v804, 1.0
        %v850 = vadd.f32 %v806, 1.0
        %v851 = vadd.f32 %v808, 1.0
        %v852 = vadd.f32 %v810, 1.0
        %v853 = vadd.f32 %v812, 1.0
        %v854 = vadd.f32 %v814, 1.0
        %v855 = vadd.f32 %v816, 1.0
        %v856 = vadd.f32 %v818, 1.0
        %v857 = vadd.f32 %v820, 1.0
        %v858 = vadd.f32 %v822, 1.0
        %v859 = vadd.f32 %v824, 1.0
        %v860 = vadd.f32 %v826, 1.0
        %v861 = vadd.f32 %v828, 1.0
        %v862 = vadd.f32 %v830, 1.0
        %v863 = vrcp.pop %v831
        %v864 = vmul.f32 %v831, %v863
        %v865 = vsub.f32 1.0, %v864
        %v866 = vmul.f32 %v863, %v865
        %v867 = vadd.f32 %v863, %v866
        %vm868 = vweird.f32 %v831
        %vm869 = vweird.f32 %v863
        %vm870 = vmor %vm868, %vm869
        %v871 = vsel %vm870, %v863, %v867
        %v872 = vand.u32 2147483647, %v831
        %vm873 = vcmp.eq.f32.partialorder %v872, 8.507059e+37
        %v874 = vand.u32 %v831, 2147483648
        %v875 = vor.u32 1.1754944e-38, %v874
        %v876 = vsel %vm873, %v875, %v871
        %v877 = vmul.f32 1.0, %v876
        %v878 = vrcp.pop %v832
        %v879 = vmul.f32 %v832, %v878
        %v880 = vsub.f32 1.0, %v879
        %v881 = vmul.f32 %v878, %v880
        %v882 = vadd.f32 %v878, %v881
        %vm883 = vweird.f32 %v832
        %vm884 = vweird.f32 %v878
        %vm885 = vmor %vm883, %vm884
        %v886 = vsel %vm885, %v878, %v882
        %v887 = vand.u32 2147483647, %v832
        %vm888 = vcmp.eq.f32.partialorder %v887, 8.507059e+37
        %v889 = vand.u32 %v832, 2147483648
        %v890 = vor.u32 1.1754944e-38, %v889
        %v891 = vsel %vm888, %v890, %v886
        %v892 = vmul.f32 1.0, %v891
        %v893 = vrcp.pop %v833
        %v894 = vmul.f32 %v833, %v893
        %v895 = vsub.f32 1.0, %v894
        %v896 = vmul.f32 %v893, %v895
        %v897 = vadd.f32 %v893, %v896
        %vm898 = vweird.f32 %v833
        %vm899 = vweird.f32 %v893
        %vm900 = vmor %vm898, %vm899
        %v901 = vsel %vm900, %v893, %v897
        %v902 = vand.u32 2147483647, %v833
        %vm903 = vcmp.eq.f32.partialorder %v902, 8.507059e+37
        %v904 = vand.u32 %v833, 2147483648
        %v905 = vor.u32 1.1754944e-38, %v904
        %v906 = vsel %vm903, %v905, %v901
        %v907 = vmul.f32 1.0, %v906
        %v908 = vrcp.pop %v834
        %v909 = vmul.f32 %v834, %v908
        %v910 = vsub.f32 1.0, %v909
        %v911 = vmul.f32 %v908, %v910
        %v912 = vadd.f32 %v908, %v911
        %vm913 = vweird.f32 %v834
        %vm914 = vweird.f32 %v908
        %vm915 = vmor %vm913, %vm914
        %v916 = vsel %vm915, %v908, %v912
        %v917 = vand.u32 2147483647, %v834
        %vm918 = vcmp.eq.f32.partialorder %v917, 8.507059e+37
        %v919 = vand.u32 %v834, 2147483648
        %v920 = vor.u32 1.1754944e-38, %v919
        %v921 = vsel %vm918, %v920, %v916
        %v922 = vmul.f32 1.0, %v921
        %v923 = vrcp.pop %v835
        %v924 = vmul.f32 %v835, %v923
        %v925 = vsub.f32 1.0, %v924
        %v926 = vmul.f32 %v923, %v925
        %v927 = vadd.f32 %v923, %v926
        %vm928 = vweird.f32 %v835
        %vm929 = vweird.f32 %v923
        %vm930 = vmor %vm928, %vm929
        %v931 = vsel %vm930, %v923, %v927
        %v932 = vand.u32 2147483647, %v835
        %vm933 = vcmp.eq.f32.partialorder %v932, 8.507059e+37
        %v934 = vand.u32 %v835, 2147483648
        %v935 = vor.u32 1.1754944e-38, %v934
        %v936 = vsel %vm933, %v935, %v931
        %v937 = vmul.f32 1.0, %v936
        %v938 = vrcp.pop %v836
        %v939 = vmul.f32 %v836, %v938
        %v940 = vsub.f32 1.0, %v939
        %v941 = vmul.f32 %v938, %v940
        %v942 = vadd.f32 %v938, %v941
        %vm943 = vweird.f32 %v836
        %vm944 = vweird.f32 %v938
        %vm945 = vmor %vm943, %vm944
        %v946 = vsel %vm945, %v938, %v942
        %v947 = vand.u32 2147483647, %v836
        %vm948 = vcmp.eq.f32.partialorder %v947, 8.507059e+37
        %v949 = vand.u32 %v836, 2147483648
        %v950 = vor.u32 1.1754944e-38, %v949
        %v951 = vsel %vm948, %v950, %v946
        %v952 = vmul.f32 1.0, %v951
        %v953 = vrcp.pop %v837
        %v954 = vmul.f32 %v837, %v953
        %v955 = vsub.f32 1.0, %v954
        %v956 = vmul.f32 %v953, %v955
        %v957 = vadd.f32 %v953, %v956
        %vm958 = vweird.f32 %v837
        %vm959 = vweird.f32 %v953
        %vm960 = vmor %vm958, %vm959
        %v961 = vsel %vm960, %v953, %v957
        %v962 = vand.u32 2147483647, %v837
        %vm963 = vcmp.eq.f32.partialorder %v962, 8.507059e+37
        %v964 = vand.u32 %v837, 2147483648
        %v965 = vor.u32 1.1754944e-38, %v964
        %v966 = vsel %vm963, %v965, %v961
        %v967 = vmul.f32 1.0, %v966
        %v968 = vrcp.pop %v838
        %v969 = vmul.f32 %v838, %v968
        %v970 = vsub.f32 1.0, %v969
        %v971 = vmul.f32 %v968, %v970
        %v972 = vadd.f32 %v968, %v971
        %vm973 = vweird.f32 %v838
        %vm974 = vweird.f32 %v968
        %vm975 = vmor %vm973, %vm974
        %v976 = vsel %vm975, %v968, %v972
        %v977 = vand.u32 2147483647, %v838
        %vm978 = vcmp.eq.f32.partialorder %v977, 8.507059e+37
        %v979 = vand.u32 %v838, 2147483648
        %v980 = vor.u32 1.1754944e-38, %v979
        %v981 = vsel %vm978, %v980, %v976
        %v982 = vmul.f32 1.0, %v981
        %v983 = vrcp.pop %v839
        %v984 = vmul.f32 %v839, %v983
        %v985 = vsub.f32 1.0, %v984
        %v986 = vmul.f32 %v983, %v985
        %v987 = vadd.f32 %v983, %v986
        %vm988 = vweird.f32 %v839
        %vm989 = vweird.f32 %v983
        %vm990 = vmor %vm988, %vm989
        %v991 = vsel %vm990, %v983, %v987
        %v992 = vand.u32 2147483647, %v839
        %vm993 = vcmp.eq.f32.partialorder %v992, 8.507059e+37
        %v994 = vand.u32 %v839, 2147483648
        %v995 = vor.u32 1.1754944e-38, %v994
        %v996 = vsel %vm993, %v995, %v991
        %v997 = vmul.f32 1.0, %v996
        %v998 = vrcp.pop %v840
        %v999 = vmul.f32 %v840, %v998
        %v1000 = vsub.f32 1.0, %v999
        %v1001 = vmul.f32 %v998, %v1000
        %v1002 = vadd.f32 %v998, %v1001
        %vm1003 = vweird.f32 %v840
        %vm1004 = vweird.f32 %v998
        %vm1005 = vmor %vm1003, %vm1004
        %v1006 = vsel %vm1005, %v998, %v1002
        %v1007 = vand.u32 2147483647, %v840
        %vm1008 = vcmp.eq.f32.partialorder %v1007, 8.507059e+37
        %v1009 = vand.u32 %v840, 2147483648
        %v1010 = vor.u32 1.1754944e-38, %v1009
        %v1011 = vsel %vm1008, %v1010, %v1006
        %v1012 = vmul.f32 1.0, %v1011
        %v1013 = vrcp.pop %v841
        %v1014 = vmul.f32 %v841, %v1013
        %v1015 = vsub.f32 1.0, %v1014
        %v1016 = vmul.f32 %v1013, %v1015
        %v1017 = vadd.f32 %v1013, %v1016
        %vm1018 = vweird.f32 %v841
        %vm1019 = vweird.f32 %v1013
        %vm1020 = vmor %vm1018, %vm1019
        %v1021 = vsel %vm1020, %v1013, %v1017
        %v1022 = vand.u32 2147483647, %v841
        %vm1023 = vcmp.eq.f32.partialorder %v1022, 8.507059e+37
        %v1024 = vand.u32 %v841, 2147483648
        %v1025 = vor.u32 1.1754944e-38, %v1024
        %v1026 = vsel %vm1023, %v1025, %v1021
        %v1027 = vmul.f32 1.0, %v1026
        %v1028 = vrcp.pop %v842
        %v1029 = vmul.f32 %v842, %v1028
        %v1030 = vsub.f32 1.0, %v1029
        %v1031 = vmul.f32 %v1028, %v1030
        %v1032 = vadd.f32 %v1028, %v1031
        %vm1033 = vweird.f32 %v842
        %vm1034 = vweird.f32 %v1028
        %vm1035 = vmor %vm1033, %vm1034
        %v1036 = vsel %vm1035, %v1028, %v1032
        %v1037 = vand.u32 2147483647, %v842
        %vm1038 = vcmp.eq.f32.partialorder %v1037, 8.507059e+37
        %v1039 = vand.u32 %v842, 2147483648
        %v1040 = vor.u32 1.1754944e-38, %v1039
        %v1041 = vsel %vm1038, %v1040, %v1036
        %v1042 = vmul.f32 1.0, %v1041
        %v1043 = vrcp.pop %v843
        %v1044 = vmul.f32 %v843, %v1043
        %v1045 = vsub.f32 1.0, %v1044
        %v1046 = vmul.f32 %v1043, %v1045
        %v1047 = vadd.f32 %v1043, %v1046
        %vm1048 = vweird.f32 %v843
        %vm1049 = vweird.f32 %v1043
        %vm1050 = vmor %vm1048, %vm1049
        %v1051 = vsel %vm1050, %v1043, %v1047
        %v1052 = vand.u32 2147483647, %v843
        %vm1053 = vcmp.eq.f32.partialorder %v1052, 8.507059e+37
        %v1054 = vand.u32 %v843, 2147483648
        %v1055 = vor.u32 1.1754944e-38, %v1054
        %v1056 = vsel %vm1053, %v1055, %v1051
        %v1057 = vmul.f32 1.0, %v1056
        %v1058 = vrcp.pop %v844
        %v1059 = vmul.f32 %v844, %v1058
        %v1060 = vsub.f32 1.0, %v1059
        %v1061 = vmul.f32 %v1058, %v1060
        %v1062 = vadd.f32 %v1058, %v1061
        %vm1063 = vweird.f32 %v844
        %vm1064 = vweird.f32 %v1058
        %vm1065 = vmor %vm1063, %vm1064
        %v1066 = vsel %vm1065, %v1058, %v1062
        %v1067 = vand.u32 2147483647, %v844
        %vm1068 = vcmp.eq.f32.partialorder %v1067, 8.507059e+37
        %v1069 = vand.u32 %v844, 2147483648
        %v1070 = vor.u32 1.1754944e-38, %v1069
        %v1071 = vsel %vm1068, %v1070, %v1066
        %v1072 = vmul.f32 1.0, %v1071
        %v1073 = vrcp.pop %v845
        %v1074 = vmul.f32 %v845, %v1073
        %v1075 = vsub.f32 1.0, %v1074
        %v1076 = vmul.f32 %v1073, %v1075
        %v1077 = vadd.f32 %v1073, %v1076
        %vm1078 = vweird.f32 %v845
        %vm1079 = vweird.f32 %v1073
        %vm1080 = vmor %vm1078, %vm1079
        %v1081 = vsel %vm1080, %v1073, %v1077
        %v1082 = vand.u32 2147483647, %v845
        %vm1083 = vcmp.eq.f32.partialorder %v1082, 8.507059e+37
        %v1084 = vand.u32 %v845, 2147483648
        %v1085 = vor.u32 1.1754944e-38, %v1084
        %v1086 = vsel %vm1083, %v1085, %v1081
        %v1087 = vmul.f32 1.0, %v1086
        %v1088 = vrcp.pop %v846
        %v1089 = vmul.f32 %v846, %v1088
        %v1090 = vsub.f32 1.0, %v1089
        %v1091 = vmul.f32 %v1088, %v1090
        %v1092 = vadd.f32 %v1088, %v1091
        %vm1093 = vweird.f32 %v846
        %vm1094 = vweird.f32 %v1088
        %vm1095 = vmor %vm1093, %vm1094
        %v1096 = vsel %vm1095, %v1088, %v1092
        %v1097 = vand.u32 2147483647, %v846
        %vm1098 = vcmp.eq.f32.partialorder %v1097, 8.507059e+37
        %v1099 = vand.u32 %v846, 2147483648
        %v1100 = vor.u32 1.1754944e-38, %v1099
        %v1101 = vsel %vm1098, %v1100, %v1096
        %v1102 = vmul.f32 1.0, %v1101
        %v1103 = vrcp.pop %v847
        %v1104 = vmul.f32 %v847, %v1103
        %v1105 = vsub.f32 1.0, %v1104
        %v1106 = vmul.f32 %v1103, %v1105
        %v1107 = vadd.f32 %v1103, %v1106
        %vm1108 = vweird.f32 %v847
        %vm1109 = vweird.f32 %v1103
        %vm1110 = vmor %vm1108, %vm1109
        %v1111 = vsel %vm1110, %v1103, %v1107
        %v1112 = vand.u32 2147483647, %v847
        %vm1113 = vcmp.eq.f32.partialorder %v1112, 8.507059e+37
        %v1114 = vand.u32 %v847, 2147483648
        %v1115 = vor.u32 1.1754944e-38, %v1114
        %v1116 = vsel %vm1113, %v1115, %v1111
        %v1117 = vmul.f32 1.0, %v1116
        %v1118 = vrcp.pop %v848
        %v1119 = vmul.f32 %v848, %v1118
        %v1120 = vsub.f32 1.0, %v1119
        %v1121 = vmul.f32 %v1118, %v1120
        %v1122 = vadd.f32 %v1118, %v1121
        %vm1123 = vweird.f32 %v848
        %vm1124 = vweird.f32 %v1118
        %vm1125 = vmor %vm1123, %vm1124
        %v1126 = vsel %vm1125, %v1118, %v1122
        %v1127 = vand.u32 2147483647, %v848
        %vm1128 = vcmp.eq.f32.partialorder %v1127, 8.507059e+37
        %v1129 = vand.u32 %v848, 2147483648
        %v1130 = vor.u32 1.1754944e-38, %v1129
        %v1131 = vsel %vm1128, %v1130, %v1126
        %v1132 = vmul.f32 1.0, %v1131
        %v1133 = vrcp.pop %v849
        %v1134 = vmul.f32 %v849, %v1133
        %v1135 = vsub.f32 1.0, %v1134
        %v1136 = vmul.f32 %v1133, %v1135
        %v1137 = vadd.f32 %v1133, %v1136
        %vm1138 = vweird.f32 %v849
        %vm1139 = vweird.f32 %v1133
        %vm1140 = vmor %vm1138, %vm1139
        %v1141 = vsel %vm1140, %v1133, %v1137
        %v1142 = vand.u32 2147483647, %v849
        %vm1143 = vcmp.eq.f32.partialorder %v1142, 8.507059e+37
        %v1144 = vand.u32 %v849, 2147483648
        %v1145 = vor.u32 1.1754944e-38, %v1144
        %v1146 = vsel %vm1143, %v1145, %v1141
        %v1147 = vmul.f32 1.0, %v1146
        %v1148 = vrcp.pop %v850
        %v1149 = vmul.f32 %v850, %v1148
        %v1150 = vsub.f32 1.0, %v1149
        %v1151 = vmul.f32 %v1148, %v1150
        %v1152 = vadd.f32 %v1148, %v1151
        %vm1153 = vweird.f32 %v850
        %vm1154 = vweird.f32 %v1148
        %vm1155 = vmor %vm1153, %vm1154
        %v1156 = vsel %vm1155, %v1148, %v1152
        %v1157 = vand.u32 2147483647, %v850
        %vm1158 = vcmp.eq.f32.partialorder %v1157, 8.507059e+37
        %v1159 = vand.u32 %v850, 2147483648
        %v1160 = vor.u32 1.1754944e-38, %v1159
        %v1161 = vsel %vm1158, %v1160, %v1156
        %v1162 = vmul.f32 1.0, %v1161
        %v1163 = vrcp.pop %v851
        %v1164 = vmul.f32 %v851, %v1163
        %v1165 = vsub.f32 1.0, %v1164
        %v1166 = vmul.f32 %v1163, %v1165
        %v1167 = vadd.f32 %v1163, %v1166
        %vm1168 = vweird.f32 %v851
        %vm1169 = vweird.f32 %v1163
        %vm1170 = vmor %vm1168, %vm1169
        %v1171 = vsel %vm1170, %v1163, %v1167
        %v1172 = vand.u32 2147483647, %v851
        %vm1173 = vcmp.eq.f32.partialorder %v1172, 8.507059e+37
        %v1174 = vand.u32 %v851, 2147483648
        %v1175 = vor.u32 1.1754944e-38, %v1174
        %v1176 = vsel %vm1173, %v1175, %v1171
        %v1177 = vmul.f32 1.0, %v1176
        %v1178 = vrcp.pop %v852
        %v1179 = vmul.f32 %v852, %v1178
        %v1180 = vsub.f32 1.0, %v1179
        %v1181 = vmul.f32 %v1178, %v1180
        %v1182 = vadd.f32 %v1178, %v1181
        %vm1183 = vweird.f32 %v852
        %vm1184 = vweird.f32 %v1178
        %vm1185 = vmor %vm1183, %vm1184
        %v1186 = vsel %vm1185, %v1178, %v1182
        %v1187 = vand.u32 2147483647, %v852
        %vm1188 = vcmp.eq.f32.partialorder %v1187, 8.507059e+37
        %v1189 = vand.u32 %v852, 2147483648
        %v1190 = vor.u32 1.1754944e-38, %v1189
        %v1191 = vsel %vm1188, %v1190, %v1186
        %v1192 = vmul.f32 1.0, %v1191
        %v1193 = vrcp.pop %v853
        %v1194 = vmul.f32 %v853, %v1193
        %v1195 = vsub.f32 1.0, %v1194
        %v1196 = vmul.f32 %v1193, %v1195
        %v1197 = vadd.f32 %v1193, %v1196
        %vm1198 = vweird.f32 %v853
        %vm1199 = vweird.f32 %v1193
        %vm1200 = vmor %vm1198, %vm1199
        %v1201 = vsel %vm1200, %v1193, %v1197
        %v1202 = vand.u32 2147483647, %v853
        %vm1203 = vcmp.eq.f32.partialorder %v1202, 8.507059e+37
        %v1204 = vand.u32 %v853, 2147483648
        %v1205 = vor.u32 1.1754944e-38, %v1204
        %v1206 = vsel %vm1203, %v1205, %v1201
        %v1207 = vmul.f32 1.0, %v1206
        %v1208 = vrcp.pop %v854
        %v1209 = vmul.f32 %v854, %v1208
        %v1210 = vsub.f32 1.0, %v1209
        %v1211 = vmul.f32 %v1208, %v1210
        %v1212 = vadd.f32 %v1208, %v1211
        %vm1213 = vweird.f32 %v854
        %vm1214 = vweird.f32 %v1208
        %vm1215 = vmor %vm1213, %vm1214
        %v1216 = vsel %vm1215, %v1208, %v1212
        %v1217 = vand.u32 2147483647, %v854
        %vm1218 = vcmp.eq.f32.partialorder %v1217, 8.507059e+37
        %v1219 = vand.u32 %v854, 2147483648
        %v1220 = vor.u32 1.1754944e-38, %v1219
        %v1221 = vsel %vm1218, %v1220, %v1216
        %v1222 = vmul.f32 1.0, %v1221
        %v1223 = vrcp.pop %v855
        %v1224 = vmul.f32 %v855, %v1223
        %v1225 = vsub.f32 1.0, %v1224
        %v1226 = vmul.f32 %v1223, %v1225
        %v1227 = vadd.f32 %v1223, %v1226
        %vm1228 = vweird.f32 %v855
        %vm1229 = vweird.f32 %v1223
        %vm1230 = vmor %vm1228, %vm1229
        %v1231 = vsel %vm1230, %v1223, %v1227
        %v1232 = vand.u32 2147483647, %v855
        %vm1233 = vcmp.eq.f32.partialorder %v1232, 8.507059e+37
        %v1234 = vand.u32 %v855, 2147483648
        %v1235 = vor.u32 1.1754944e-38, %v1234
        %v1236 = vsel %vm1233, %v1235, %v1231
        %v1237 = vmul.f32 1.0, %v1236
        %v1238 = vrcp.pop %v856
        %v1239 = vmul.f32 %v856, %v1238
        %v1240 = vsub.f32 1.0, %v1239
        %v1241 = vmul.f32 %v1238, %v1240
        %v1242 = vadd.f32 %v1238, %v1241
        %vm1243 = vweird.f32 %v856
        %vm1244 = vweird.f32 %v1238
        %vm1245 = vmor %vm1243, %vm1244
        %v1246 = vsel %vm1245, %v1238, %v1242
        %v1247 = vand.u32 2147483647, %v856
        %vm1248 = vcmp.eq.f32.partialorder %v1247, 8.507059e+37
        %v1249 = vand.u32 %v856, 2147483648
        %v1250 = vor.u32 1.1754944e-38, %v1249
        %v1251 = vsel %vm1248, %v1250, %v1246
        %v1252 = vmul.f32 1.0, %v1251
        %v1253 = vrcp.pop %v857
        %v1254 = vmul.f32 %v857, %v1253
        %v1255 = vsub.f32 1.0, %v1254
        %v1256 = vmul.f32 %v1253, %v1255
        %v1257 = vadd.f32 %v1253, %v1256
        %vm1258 = vweird.f32 %v857
        %vm1259 = vweird.f32 %v1253
        %vm1260 = vmor %vm1258, %vm1259
        %v1261 = vsel %vm1260, %v1253, %v1257
        %v1262 = vand.u32 2147483647, %v857
        %vm1263 = vcmp.eq.f32.partialorder %v1262, 8.507059e+37
        %v1264 = vand.u32 %v857, 2147483648
        %v1265 = vor.u32 1.1754944e-38, %v1264
        %v1266 = vsel %vm1263, %v1265, %v1261
        %v1267 = vmul.f32 1.0, %v1266
        %v1268 = vrcp.pop %v858
        %v1269 = vmul.f32 %v858, %v1268
        %v1270 = vsub.f32 1.0, %v1269
        %v1271 = vmul.f32 %v1268, %v1270
        %v1272 = vadd.f32 %v1268, %v1271
        %vm1273 = vweird.f32 %v858
        %vm1274 = vweird.f32 %v1268
        %vm1275 = vmor %vm1273, %vm1274
        %v1276 = vsel %vm1275, %v1268, %v1272
        %v1277 = vand.u32 2147483647, %v858
        %vm1278 = vcmp.eq.f32.partialorder %v1277, 8.507059e+37
        %v1279 = vand.u32 %v858, 2147483648
        %v1280 = vor.u32 1.1754944e-38, %v1279
        %v1281 = vsel %vm1278, %v1280, %v1276
        %v1282 = vmul.f32 1.0, %v1281
        %v1283 = vrcp.pop %v859
        %v1284 = vmul.f32 %v859, %v1283
        %v1285 = vsub.f32 1.0, %v1284
        %v1286 = vmul.f32 %v1283, %v1285
        %v1287 = vadd.f32 %v1283, %v1286
        %vm1288 = vweird.f32 %v859
        %vm1289 = vweird.f32 %v1283
        %vm1290 = vmor %vm1288, %vm1289
        %v1291 = vsel %vm1290, %v1283, %v1287
        %v1292 = vand.u32 2147483647, %v859
        %vm1293 = vcmp.eq.f32.partialorder %v1292, 8.507059e+37
        %v1294 = vand.u32 %v859, 2147483648
        %v1295 = vor.u32 1.1754944e-38, %v1294
        %v1296 = vsel %vm1293, %v1295, %v1291
        %v1297 = vmul.f32 1.0, %v1296
        %v1298 = vrcp.pop %v860
        %v1299 = vmul.f32 %v860, %v1298
        %v1300 = vsub.f32 1.0, %v1299
        %v1301 = vmul.f32 %v1298, %v1300
        %v1302 = vadd.f32 %v1298, %v1301
        %vm1303 = vweird.f32 %v860
        %vm1304 = vweird.f32 %v1298
        %vm1305 = vmor %vm1303, %vm1304
        %v1306 = vsel %vm1305, %v1298, %v1302
        %v1307 = vand.u32 2147483647, %v860
        %vm1308 = vcmp.eq.f32.partialorder %v1307, 8.507059e+37
        %v1309 = vand.u32 %v860, 2147483648
        %v1310 = vor.u32 1.1754944e-38, %v1309
        %v1311 = vsel %vm1308, %v1310, %v1306
        %v1312 = vmul.f32 1.0, %v1311
        %v1313 = vrcp.pop %v861
        %v1314 = vmul.f32 %v861, %v1313
        %v1315 = vsub.f32 1.0, %v1314
        %v1316 = vmul.f32 %v1313, %v1315
        %v1317 = vadd.f32 %v1313, %v1316
        %vm1318 = vweird.f32 %v861
        %vm1319 = vweird.f32 %v1313
        %vm1320 = vmor %vm1318, %vm1319
        %v1321 = vsel %vm1320, %v1313, %v1317
        %v1322 = vand.u32 2147483647, %v861
        %vm1323 = vcmp.eq.f32.partialorder %v1322, 8.507059e+37
        %v1324 = vand.u32 %v861, 2147483648
        %v1325 = vor.u32 1.1754944e-38, %v1324
        %v1326 = vsel %vm1323, %v1325, %v1321
        %v1327 = vmul.f32 1.0, %v1326
        %v1328 = vrcp.pop %v862
        %v1329 = vmul.f32 %v862, %v1328
        %v1330 = vsub.f32 1.0, %v1329
        %v1331 = vmul.f32 %v1328, %v1330
        %v1332 = vadd.f32 %v1328, %v1331
        %vm1333 = vweird.f32 %v862
        %vm1334 = vweird.f32 %v1328
        %vm1335 = vmor %vm1333, %vm1334
        %v1336 = vsel %vm1335, %v1328, %v1332
        %v1337 = vand.u32 2147483647, %v862
        %vm1338 = vcmp.eq.f32.partialorder %v1337, 8.507059e+37
        %v1339 = vand.u32 %v862, 2147483648
        %v1340 = vor.u32 1.1754944e-38, %v1339
        %v1341 = vsel %vm1338, %v1340, %v1336
        %v1342 = vmul.f32 1.0, %v1341
        %vm1343 = vcmask 7168
        %1344 = vst.msk [vmem:[%s282] sm:$0xff] %vm1343, %v877
        %1345 = vst.msk [vmem:[%s282 + $0x8] sm:$0xff] %vm1343, %v892
        %1346 = vst.msk [vmem:[%s282 + $0x10] sm:$0xff] %vm1343, %v907
        %1347 = vst.msk [vmem:[%s282 + $0x18] sm:$0xff] %vm1343, %v922
        %1348 = vst.msk [vmem:[%s282 + $0x20] sm:$0xff] %vm1343, %v937
        %1349 = vst.msk [vmem:[%s282 + $0x28] sm:$0xff] %vm1343, %v952
        %1350 = vst.msk [vmem:[%s282 + $0x30] sm:$0xff] %vm1343, %v967
        %1351 = vst.msk [vmem:[%s282 + $0x38] sm:$0xff] %vm1343, %v982
        %1352 = vst.msk [vmem:[%s282 + $0x40] sm:$0xff] %vm1343, %v997
        %1353 = vst.msk [vmem:[%s282 + $0x48] sm:$0xff] %vm1343, %v1012
        %1354 = vst.msk [vmem:[%s282 + $0x50] sm:$0xff] %vm1343, %v1027
        %1355 = vst.msk [vmem:[%s282 + $0x58] sm:$0xff] %vm1343, %v1042
        %1356 = vst.msk [vmem:[%s282 + $0x60] sm:$0xff] %vm1343, %v1057
        %1357 = vst.msk [vmem:[%s282 + $0x68] sm:$0xff] %vm1343, %v1072
        %1358 = vst.msk [vmem:[%s282 + $0x70] sm:$0xff] %vm1343, %v1087
        %1359 = vst.msk [vmem:[%s282 + $0x78] sm:$0xff] %vm1343, %v1102
        %1360 = vst.msk [vmem:[%s282 + $0x80] sm:$0xff] %vm1343, %v1117
        %1361 = vst.msk [vmem:[%s282 + $0x88] sm:$0xff] %vm1343, %v1132
        %1362 = vst.msk [vmem:[%s282 + $0x90] sm:$0xff] %vm1343, %v1147
        %1363 = vst.msk [vmem:[%s282 + $0x98] sm:$0xff] %vm1343, %v1162
        %1364 = vst.msk [vmem:[%s282 + $0xa0] sm:$0xff] %vm1343, %v1177
        %1365 = vst.msk [vmem:[%s282 + $0xa8] sm:$0xff] %vm1343, %v1192
        %1366 = vst.msk [vmem:[%s282 + $0xb0] sm:$0xff] %vm1343, %v1207
        %1367 = vst.msk [vmem:[%s282 + $0xb8] sm:$0xff] %vm1343, %v1222
        %1368 = vst.msk [vmem:[%s282 + $0xc0] sm:$0xff] %vm1343, %v1237
        %1369 = vst.msk [vmem:[%s282 + $0xc8] sm:$0xff] %vm1343, %v1252
        %1370 = vst.msk [vmem:[%s282 + $0xd0] sm:$0xff] %vm1343, %v1267
        %1371 = vst.msk [vmem:[%s282 + $0xd8] sm:$0xff] %vm1343, %v1282
        %1372 = vst.msk [vmem:[%s282 + $0xe0] sm:$0xff] %vm1343, %v1297
        %1373 = vst.msk [vmem:[%s282 + $0xe8] sm:$0xff] %vm1343, %v1312
        %1374 = vst.msk [vmem:[%s282 + $0xf0] sm:$0xff] %vm1343, %v1327
        %1375 = vst.msk [vmem:[%s282 + $0xf8] sm:$0xff] %vm1343, %v1342
        %s1376 = sand.u32 %s140, 1
        %s1377 = sand.u32 %s140, 1
        %s1378 = smul.addr %s1377, 256
        %s1379 = scalar_lea.vmem [#allocation8], %s1378
        // Predicated region
        $region53: #{tpu_custom_call.1} parent=39 // pred_check
          %p1380 = pneg %p150
        $region54: #{tpu_custom_call.1} parent=39 // pred_check_branch
          %1382 = sbr.rel (%p1380) target = $region56
        $region55: #{tpu_custom_call.1} parent=39 // pred_region
          %s1383 = smul.u32 32, %s22
          %s1384 = ssub.s32 98, %s1383
          %p1385 = scmp.lt.s32.totalorder %s1384, 32
          %s1386 = scalar_select %p1385, %s1384, 32
          %s1387 = smul.u32 8, %s1386
          %p1388 = scmp.ne.s32.totalorder 0, %s1387
          %s1389 = smul.addr %s1383, 8
          %s1390 = scalar_lea.vmem %s5, %s1389
          // Predicated region
          $region57: #{tpu_custom_call.1} parent=55 // pred_check
            %p1391 = pneg %p1388
          $region58: #{tpu_custom_call.1} parent=55 // pred_check_branch
            %1393 = sbr.rel (%p1391) target = $region60
          $region59: #{tpu_custom_call.1} parent=55 // pred_region
            // Predicated region
            $region61: #{tpu_custom_call.1} parent=59 // pred_check
              _
            $region62: #{tpu_custom_call.1} parent=59 // pred_check_branch
              %1395 = sbr.rel (0) target = $region64
            $region63: #{tpu_custom_call.1} parent=59 // pred_region
              // Predicated region
              $region83: #{tpu_custom_call.1} parent=63 // pred_check
                _
              $region84: #{tpu_custom_call.1} parent=63 // pred_check_branch
                %1507 = sbr.rel (0) target = $region86
              $region85: #{tpu_custom_call.1} parent=63 // pred_region
                %s1508 = sshrl.u32 %s1386, 5
                // While loop
                $region87: #{tpu_custom_call.1} parent=85 // loop_pre_header
                  _
                $region88: #{tpu_custom_call.1} parent=85 // loop_header
                  %s1510 = sphi 0, %s1512
                  %p1511 = scmp.ge.s32.totalorder %s1510, %s1508
                  %s1515 = sphi 0, %s1584
                  %s1516 = sphi %s1379, %s1587
                  %s1517 = sphi %s1390, %s1588
                $region89: #{tpu_custom_call.1} parent=85 // loop_header_branch
                  %1514 = sbr.rel (%p1511) target = $region93
                $region90: #{tpu_custom_call.1} parent=85 // loop_body
                  %v1518 = vld [vmem:[%s1516] sm:$0xff]
                  %1519 = vst [vmem:[%s1517] sm:$0xff] %v1518
                  %v1520 = vld [vmem:[%s1516 + $0x8] sm:$0xff]
                  %1521 = vst [vmem:[%s1517 + $0x8] sm:$0xff] %v1520
                  %v1522 = vld [vmem:[%s1516 + $0x10] sm:$0xff]
                  %1523 = vst [vmem:[%s1517 + $0x10] sm:$0xff] %v1522
                  %v1524 = vld [vmem:[%s1516 + $0x18] sm:$0xff]
                  %1525 = vst [vmem:[%s1517 + $0x18] sm:$0xff] %v1524
                  %v1526 = vld [vmem:[%s1516 + $0x20] sm:$0xff]
                  %1527 = vst [vmem:[%s1517 + $0x20] sm:$0xff] %v1526
                  %v1528 = vld [vmem:[%s1516 + $0x28] sm:$0xff]
                  %1529 = vst [vmem:[%s1517 + $0x28] sm:$0xff] %v1528
                  %v1530 = vld [vmem:[%s1516 + $0x30] sm:$0xff]
                  %1531 = vst [vmem:[%s1517 + $0x30] sm:$0xff] %v1530
                  %v1532 = vld [vmem:[%s1516 + $0x38] sm:$0xff]
                  %1533 = vst [vmem:[%s1517 + $0x38] sm:$0xff] %v1532
                  %v1534 = vld [vmem:[%s1516 + $0x40] sm:$0xff]
                  %1535 = vst [vmem:[%s1517 + $0x40] sm:$0xff] %v1534
                  %v1536 = vld [vmem:[%s1516 + $0x48] sm:$0xff]
                  %1537 = vst [vmem:[%s1517 + $0x48] sm:$0xff] %v1536
                  %v1538 = vld [vmem:[%s1516 + $0x50] sm:$0xff]
                  %1539 = vst [vmem:[%s1517 + $0x50] sm:$0xff] %v1538
                  %v1540 = vld [vmem:[%s1516 + $0x58] sm:$0xff]
                  %1541 = vst [vmem:[%s1517 + $0x58] sm:$0xff] %v1540
                  %v1542 = vld [vmem:[%s1516 + $0x60] sm:$0xff]
                  %1543 = vst [vmem:[%s1517 + $0x60] sm:$0xff] %v1542
                  %v1544 = vld [vmem:[%s1516 + $0x68] sm:$0xff]
                  %1545 = vst [vmem:[%s1517 + $0x68] sm:$0xff] %v1544
                  %v1546 = vld [vmem:[%s1516 + $0x70] sm:$0xff]
                  %1547 = vst [vmem:[%s1517 + $0x70] sm:$0xff] %v1546
                  %v1548 = vld [vmem:[%s1516 + $0x78] sm:$0xff]
                  %1549 = vst [vmem:[%s1517 + $0x78] sm:$0xff] %v1548
                  %v1550 = vld [vmem:[%s1516 + $0x80] sm:$0xff]
                  %1551 = vst [vmem:[%s1517 + $0x80] sm:$0xff] %v1550
                  %v1552 = vld [vmem:[%s1516 + $0x88] sm:$0xff]
                  %1553 = vst [vmem:[%s1517 + $0x88] sm:$0xff] %v1552
                  %v1554 = vld [vmem:[%s1516 + $0x90] sm:$0xff]
                  %1555 = vst [vmem:[%s1517 + $0x90] sm:$0xff] %v1554
                  %v1556 = vld [vmem:[%s1516 + $0x98] sm:$0xff]
                  %1557 = vst [vmem:[%s1517 + $0x98] sm:$0xff] %v1556
                  %v1558 = vld [vmem:[%s1516 + $0xa0] sm:$0xff]
                  %1559 = vst [vmem:[%s1517 + $0xa0] sm:$0xff] %v1558
                  %v1560 = vld [vmem:[%s1516 + $0xa8] sm:$0xff]
                  %1561 = vst [vmem:[%s1517 + $0xa8] sm:$0xff] %v1560
                  %v1562 = vld [vmem:[%s1516 + $0xb0] sm:$0xff]
                  %1563 = vst [vmem:[%s1517 + $0xb0] sm:$0xff] %v1562
                  %v1564 = vld [vmem:[%s1516 + $0xb8] sm:$0xff]
                  %1565 = vst [vmem:[%s1517 + $0xb8] sm:$0xff] %v1564
                  %v1566 = vld [vmem:[%s1516 + $0xc0] sm:$0xff]
                  %1567 = vst [vmem:[%s1517 + $0xc0] sm:$0xff] %v1566
                  %v1568 = vld [vmem:[%s1516 + $0xc8] sm:$0xff]
                  %1569 = vst [vmem:[%s1517 + $0xc8] sm:$0xff] %v1568
                  %v1570 = vld [vmem:[%s1516 + $0xd0] sm:$0xff]
                  %1571 = vst [vmem:[%s1517 + $0xd0] sm:$0xff] %v1570
                  %v1572 = vld [vmem:[%s1516 + $0xd8] sm:$0xff]
                  %1573 = vst [vmem:[%s1517 + $0xd8] sm:$0xff] %v1572
                  %v1574 = vld [vmem:[%s1516 + $0xe0] sm:$0xff]
                  %1575 = vst [vmem:[%s1517 + $0xe0] sm:$0xff] %v1574
                  %v1576 = vld [vmem:[%s1516 + $0xe8] sm:$0xff]
                  %1577 = vst [vmem:[%s1517 + $0xe8] sm:$0xff] %v1576
                  %v1578 = vld [vmem:[%s1516 + $0xf0] sm:$0xff]
                  %1579 = vst [vmem:[%s1517 + $0xf0] sm:$0xff] %v1578
                  %v1580 = vld [vmem:[%s1516 + $0xf8] sm:$0xff]
                  %1581 = vst [vmem:[%s1517 + $0xf8] sm:$0xff] %v1580
                  %s1582 = sadd.s32 1, %s1515
                  %p1583 = scmp.ge.s32.totalorder %s1582, %s1508
                  %s1584 = scalar_select %p1583, 0, %s1582
                  %s1585 = smul.u32 %s1584, 256
                  %s1586 = smul.u32 %s1584, 256
                  %s1587 = scalar_lea.vmem %s1379, %s1585 [#allocation8]
                  %s1588 = scalar_lea.vmem %s1390, %s1586
                $region91: #{tpu_custom_call.1} parent=85 // loop_footer
                  %s1512 = sadd.s32 %s1510, 1
                $region92: #{tpu_custom_call.1} parent=85 // loop_footer_branch
                  %1509 = sbr.rel target = $region88
                $region93: #{tpu_custom_call.1} parent=85 // loop_exit
                  _
                %s1589 = sshrl.u32 %s1386, 5
                %s1590 = sand.u32 %s1386, 31
                %s1591 = smul.u32 %s1589, 32
                %s1592 = smul.u32 8, %s1591
                %s1593 = scalar_lea.vmem %s1379, %s1592 [#allocation8]
                %s1594 = smul.u32 8, %s1591
                %s1595 = scalar_lea.vmem %s1390, %s1594
                // While loop
                $region94: #{tpu_custom_call.1} parent=85 // loop_pre_header
                  _
                $region95: #{tpu_custom_call.1} parent=85 // loop_header
                  %s1597 = sphi 0, %s1599
                  %p1598 = scmp.ge.s32.totalorder %s1597, %s1590
                  %s1602 = sphi 0, %s1609
                  %s1603 = sphi %s1593, %s1612
                  %s1604 = sphi %s1595, %s1613
                $region96: #{tpu_custom_call.1} parent=85 // loop_header_branch
                  %1601 = sbr.rel (%p1598) target = $region100
                $region97: #{tpu_custom_call.1} parent=85 // loop_body
                  %v1605 = vld [vmem:[%s1603] sm:$0xff]
                  %1606 = vst [vmem:[%s1604] sm:$0xff] %v1605
                  %s1607 = sadd.s32 1, %s1602
                  %p1608 = scmp.ge.s32.totalorder %s1607, %s1590
                  %s1609 = scalar_select %p1608, 0, %s1607
                  %s1610 = smul.u32 %s1609, 8
                  %s1611 = smul.u32 %s1609, 8
                  %s1612 = scalar_lea.vmem %s1593, %s1610 [#allocation8]
                  %s1613 = scalar_lea.vmem %s1595, %s1611
                $region98: #{tpu_custom_call.1} parent=85 // loop_footer
                  %s1599 = sadd.s32 %s1597, 1
                $region99: #{tpu_custom_call.1} parent=85 // loop_footer_branch
                  %1596 = sbr.rel target = $region95
                $region100: #{tpu_custom_call.1} parent=85 // loop_exit
                  _
              $region86: #{tpu_custom_call.1} parent=63 // pred_fallthru
                _
              // Predicated region
              $region101: #{tpu_custom_call.1} parent=63 // pred_check
                _
              $region102: #{tpu_custom_call.1} parent=63 // pred_check_branch
                %1615 = sbr.rel target = $region104
              $region103: #{tpu_custom_call.1} parent=63 // pred_region
                _
              $region104: #{tpu_custom_call.1} parent=63 // pred_fallthru
                _
            $region64: #{tpu_custom_call.1} parent=59 // pred_fallthru
              _
            // Predicated region
            $region65: #{tpu_custom_call.1} parent=59 // pred_check
              _
            $region66: #{tpu_custom_call.1} parent=59 // pred_check_branch
              %1397 = sbr.rel target = $region68
            $region67: #{tpu_custom_call.1} parent=59 // pred_region
              %s1399 = ssub.s32 256, 1
              %s1400 = sshrl.u32 %s1386, 5
              // While loop
              $region69: #{tpu_custom_call.1} parent=67 // loop_pre_header
                _
              $region70: #{tpu_custom_call.1} parent=67 // loop_header
                %s1402 = sphi 0, %s1404
                %p1403 = scmp.ge.s32.totalorder %s1402, %s1400
                %s1407 = sphi 0, %s1476
                %s1408 = sphi %s1379, %s1479
                %s1409 = sphi %s1390, %s1480
              $region71: #{tpu_custom_call.1} parent=67 // loop_header_branch
                %1406 = sbr.rel (%p1403) target = $region75
              $region72: #{tpu_custom_call.1} parent=67 // loop_body
                %v1410 = vld [vmem:[%s1408] sm:%s1399]
                %1411 = vst [vmem:[%s1409] sm:%s1399] %v1410
                %v1412 = vld [vmem:[%s1408 + $0x8] sm:%s1399]
                %1413 = vst [vmem:[%s1409 + $0x8] sm:%s1399] %v1412
                %v1414 = vld [vmem:[%s1408 + $0x10] sm:%s1399]
                %1415 = vst [vmem:[%s1409 + $0x10] sm:%s1399] %v1414
                %v1416 = vld [vmem:[%s1408 + $0x18] sm:%s1399]
                %1417 = vst [vmem:[%s1409 + $0x18] sm:%s1399] %v1416
                %v1418 = vld [vmem:[%s1408 + $0x20] sm:%s1399]
                %1419 = vst [vmem:[%s1409 + $0x20] sm:%s1399] %v1418
                %v1420 = vld [vmem:[%s1408 + $0x28] sm:%s1399]
                %1421 = vst [vmem:[%s1409 + $0x28] sm:%s1399] %v1420
                %v1422 = vld [vmem:[%s1408 + $0x30] sm:%s1399]
                %1423 = vst [vmem:[%s1409 + $0x30] sm:%s1399] %v1422
                %v1424 = vld [vmem:[%s1408 + $0x38] sm:%s1399]
                %1425 = vst [vmem:[%s1409 + $0x38] sm:%s1399] %v1424
                %v1426 = vld [vmem:[%s1408 + $0x40] sm:%s1399]
                %1427 = vst [vmem:[%s1409 + $0x40] sm:%s1399] %v1426
                %v1428 = vld [vmem:[%s1408 + $0x48] sm:%s1399]
                %1429 = vst [vmem:[%s1409 + $0x48] sm:%s1399] %v1428
                %v1430 = vld [vmem:[%s1408 + $0x50] sm:%s1399]
                %1431 = vst [vmem:[%s1409 + $0x50] sm:%s1399] %v1430
                %v1432 = vld [vmem:[%s1408 + $0x58] sm:%s1399]
                %1433 = vst [vmem:[%s1409 + $0x58] sm:%s1399] %v1432
                %v1434 = vld [vmem:[%s1408 + $0x60] sm:%s1399]
                %1435 = vst [vmem:[%s1409 + $0x60] sm:%s1399] %v1434
                %v1436 = vld [vmem:[%s1408 + $0x68] sm:%s1399]
                %1437 = vst [vmem:[%s1409 + $0x68] sm:%s1399] %v1436
                %v1438 = vld [vmem:[%s1408 + $0x70] sm:%s1399]
                %1439 = vst [vmem:[%s1409 + $0x70] sm:%s1399] %v1438
                %v1440 = vld [vmem:[%s1408 + $0x78] sm:%s1399]
                %1441 = vst [vmem:[%s1409 + $0x78] sm:%s1399] %v1440
                %v1442 = vld [vmem:[%s1408 + $0x80] sm:%s1399]
                %1443 = vst [vmem:[%s1409 + $0x80] sm:%s1399] %v1442
                %v1444 = vld [vmem:[%s1408 + $0x88] sm:%s1399]
                %1445 = vst [vmem:[%s1409 + $0x88] sm:%s1399] %v1444
                %v1446 = vld [vmem:[%s1408 + $0x90] sm:%s1399]
                %1447 = vst [vmem:[%s1409 + $0x90] sm:%s1399] %v1446
                %v1448 = vld [vmem:[%s1408 + $0x98] sm:%s1399]
                %1449 = vst [vmem:[%s1409 + $0x98] sm:%s1399] %v1448
                %v1450 = vld [vmem:[%s1408 + $0xa0] sm:%s1399]
                %1451 = vst [vmem:[%s1409 + $0xa0] sm:%s1399] %v1450
                %v1452 = vld [vmem:[%s1408 + $0xa8] sm:%s1399]
                %1453 = vst [vmem:[%s1409 + $0xa8] sm:%s1399] %v1452
                %v1454 = vld [vmem:[%s1408 + $0xb0] sm:%s1399]
                %1455 = vst [vmem:[%s1409 + $0xb0] sm:%s1399] %v1454
                %v1456 = vld [vmem:[%s1408 + $0xb8] sm:%s1399]
                %1457 = vst [vmem:[%s1409 + $0xb8] sm:%s1399] %v1456
                %v1458 = vld [vmem:[%s1408 + $0xc0] sm:%s1399]
                %1459 = vst [vmem:[%s1409 + $0xc0] sm:%s1399] %v1458
                %v1460 = vld [vmem:[%s1408 + $0xc8] sm:%s1399]
                %1461 = vst [vmem:[%s1409 + $0xc8] sm:%s1399] %v1460
                %v1462 = vld [vmem:[%s1408 + $0xd0] sm:%s1399]
                %1463 = vst [vmem:[%s1409 + $0xd0] sm:%s1399] %v1462
                %v1464 = vld [vmem:[%s1408 + $0xd8] sm:%s1399]
                %1465 = vst [vmem:[%s1409 + $0xd8] sm:%s1399] %v1464
                %v1466 = vld [vmem:[%s1408 + $0xe0] sm:%s1399]
                %1467 = vst [vmem:[%s1409 + $0xe0] sm:%s1399] %v1466
                %v1468 = vld [vmem:[%s1408 + $0xe8] sm:%s1399]
                %1469 = vst [vmem:[%s1409 + $0xe8] sm:%s1399] %v1468
                %v1470 = vld [vmem:[%s1408 + $0xf0] sm:%s1399]
                %1471 = vst [vmem:[%s1409 + $0xf0] sm:%s1399] %v1470
                %v1472 = vld [vmem:[%s1408 + $0xf8] sm:%s1399]
                %1473 = vst [vmem:[%s1409 + $0xf8] sm:%s1399] %v1472
                %s1474 = sadd.s32 1, %s1407
                %p1475 = scmp.ge.s32.totalorder %s1474, %s1400
                %s1476 = scalar_select %p1475, 0, %s1474
                %s1477 = smul.u32 %s1476, 256
                %s1478 = smul.u32 %s1476, 256
                %s1479 = scalar_lea.vmem %s1379, %s1477 [#allocation8]
                %s1480 = scalar_lea.vmem %s1390, %s1478
              $region73: #{tpu_custom_call.1} parent=67 // loop_footer
                %s1404 = sadd.s32 %s1402, 1
              $region74: #{tpu_custom_call.1} parent=67 // loop_footer_branch
                %1401 = sbr.rel target = $region70
              $region75: #{tpu_custom_call.1} parent=67 // loop_exit
                _
              %s1481 = sshrl.u32 %s1386, 5
              %s1482 = sand.u32 %s1386, 31
              %s1483 = smul.u32 %s1481, 32
              %s1484 = smul.u32 8, %s1483
              %s1485 = scalar_lea.vmem %s1379, %s1484 [#allocation8]
              %s1486 = smul.u32 8, %s1483
              %s1487 = scalar_lea.vmem %s1390, %s1486
              // While loop
              $region76: #{tpu_custom_call.1} parent=67 // loop_pre_header
                _
              $region77: #{tpu_custom_call.1} parent=67 // loop_header
                %s1489 = sphi 0, %s1491
                %p1490 = scmp.ge.s32.totalorder %s1489, %s1482
                %s1494 = sphi 0, %s1501
                %s1495 = sphi %s1485, %s1504
                %s1496 = sphi %s1487, %s1505
              $region78: #{tpu_custom_call.1} parent=67 // loop_header_branch
                %1493 = sbr.rel (%p1490) target = $region82
              $region79: #{tpu_custom_call.1} parent=67 // loop_body
                %v1497 = vld [vmem:[%s1495] sm:%s1399]
                %1498 = vst [vmem:[%s1496] sm:%s1399] %v1497
                %s1499 = sadd.s32 1, %s1494
                %p1500 = scmp.ge.s32.totalorder %s1499, %s1482
                %s1501 = scalar_select %p1500, 0, %s1499
                %s1502 = smul.u32 %s1501, 8
                %s1503 = smul.u32 %s1501, 8
                %s1504 = scalar_lea.vmem %s1485, %s1502 [#allocation8]
                %s1505 = scalar_lea.vmem %s1487, %s1503
              $region80: #{tpu_custom_call.1} parent=67 // loop_footer
                %s1491 = sadd.s32 %s1489, 1
              $region81: #{tpu_custom_call.1} parent=67 // loop_footer_branch
                %1488 = sbr.rel target = $region77
              $region82: #{tpu_custom_call.1} parent=67 // loop_exit
                _
            $region68: #{tpu_custom_call.1} parent=59 // pred_fallthru
              _
          $region60: #{tpu_custom_call.1} parent=55 // pred_fallthru
            _
          %1616 = vnop
        $region56: #{tpu_custom_call.1} parent=39 // pred_fallthru
          _
      $region40: #{tpu_custom_call.1} parent=5 // pred_fallthru
        _
      %p1617 = scmp.le.s32.totalorder 2, %s17
      // Predicated region
      $region105: #{tpu_custom_call.1} parent=5 // pred_check
        %p1618 = pneg %p1617
      $region106: #{tpu_custom_call.1} parent=5 // pred_check_branch
        %1620 = sbr.rel (%p1618) target = $region108
      $region107: #{tpu_custom_call.1} parent=5 // pred_region
        %s1621 = ssub.s32 %s17, 2
        // Predicated region
        $region109: #{tpu_custom_call.1} parent=107 // pred_check
          %p1622 = pneg %p156
        $region110: #{tpu_custom_call.1} parent=107 // pred_check_branch
          %1624 = sbr.rel (%p1622) target = $region112
        $region111: #{tpu_custom_call.1} parent=107 // pred_region
          %s1625 = sand.u32 %s141, 1
          %s1626 = sand.u32 %s141, 1
          %s1627 = smul.addr %s1626, 256
          %s1628 = scalar_lea.vmem [#allocation8], %s1627
        $region112: #{tpu_custom_call.1} parent=107 // pred_fallthru
          _
      $region108: #{tpu_custom_call.1} parent=5 // pred_fallthru
        _
    $region6: #{tpu_custom_call.1} parent=1 // loop_footer
      %s21 = sadd.s32 1, %s17
    $region7: #{tpu_custom_call.1} parent=1 // loop_footer_branch
      %16 = sbr.rel target = $region3
    $region8: #{tpu_custom_call.1} parent=1 // loop_exit
      _
    %1629 = vsyncpa [#allocation4], 1
    %s1630 = scalar_lea.sflag [#allocation4], 1
    %1631 = vsyncpa %s1630, 1
    %1632 = vsyncpa [#allocation6], 1

</llo_original>
